<compile_context>
chip_gen: v7x
topology: tpu7x:2x2x1
jax: 0.10.0
libtpu: 0.0.40
codegen_flags: <defaults>
</compile_context>

<pallas_src>
import jax
import jax.numpy as jnp
from jax.experimental import pallas as pl
from jax.experimental.pallas import tpu as pltpu


# ---------------------------------------------------------------------------
# Cheap bounded-range sine (VPU only, ~18 ops/element).
# ---------------------------------------------------------------------------
_INV_PI = 0.3183098861837907
_PI_HI = 3.140625              # 9-bit-mantissa head of pi (k * PI_HI is exact)
_PI_LO = 9.67653589793e-04     # pi - PI_HI


def _fast_sin(x):
    """sin(x) via reduction to [-pi/2, pi/2] + odd degree-11 polynomial.

    Accurate to ~1e-6 absolute for |x| up to ~1e3; SIREN pre-activations in
    this module are O(10).  Avoids the much larger generic sin expansion on
    the binding VALU slot.
    """
    k = jnp.floor(x * _INV_PI + 0.5)              # k = round(x / pi)
    r = (x - k * _PI_HI) - k * _PI_LO             # r = x - k*pi (Cody-Waite)
    parity = k - 2.0 * jnp.floor(k * 0.5)         # 0.0 if k even, 1.0 if odd
    sign = 1.0 - 2.0 * parity                     # (-1)^k
    r2 = r * r
    p = -2.5052108e-08
    p = p * r2 + 2.7557319e-06
    p = p * r2 - 1.9841270e-04
    p = p * r2 + 8.3333333e-03
    p = p * r2 - 1.6666667e-01
    p = p * r2 + 1.0
    return (sign * r) * p


# ---------------------------------------------------------------------------
# Kernel body.
# ---------------------------------------------------------------------------
def _mlp_kernel(cord_ref, w1_ref, w2_ref, w3_ref, out_ref, h1_ref):
    # cord_ref: (3, TM)   rows 0..1 = (x, y) transposed, row 2 = 1.0
    # w1_ref:   (H, 3)    [w0*W1 | w0*b1]
    # w2_ref:   (H, H+1)  [w0*W2 | w0*b2]
    # w3_ref:   (1, H)
    # out_ref:  (1, TM)   lane-dense output block
    # h1_ref:   (H+1, TM) VMEM scratch; last row is the bias lane for layer 2
    H = w1_ref.shape[0]
    tm = cord_ref.shape[1]

    # ---- Layer 1 (+ bias) on the MXU: (H,3) @ (3,TM).
    h1 = _fast_sin(jnp.dot(w1_ref[...], cord_ref[...],
                           preferred_element_type=jnp.float32))
    h1_ref[:H, :] = h1
    # Bias row (cheap (1,TM) store each step; scratch is per-core, so do not
    # rely on a program_id==0 init under megacore sharding).
    h1_ref[H:, :] = jnp.ones((1, tm), jnp.float32)

    # ---- Layer 2 (+ bias) on the MXU: (H,H+1) @ (H+1,TM).
    h2 = _fast_sin(jnp.dot(w2_ref[...], h1_ref[...],
                           preferred_element_type=jnp.float32))

    # ---- Layer 3: (1,H) @ (H,TM) -> lane-dense (1,TM) output block.
    out_ref[...] = jnp.dot(w3_ref[...], h2, preferred_element_type=jnp.float32)


# ---------------------------------------------------------------------------
# Tiling plan.
# ---------------------------------------------------------------------------
def _round_up(x, m):
    return ((x + m - 1) // m) * m


def _chip_has_two_tensorcores():
    """Heuristic v7x-class detection (perf-only; safe fallback = False)."""
    try:
        kind = jax.devices()[0].device_kind.lower()
    except Exception:
        return False
    return ("v7" in kind) or ("7x" in kind)


def _plan_tiles(n, *, max_tile, even_steps):
    """Return (tile_m, n_pad) with tile_m % 128 == 0 and n_pad % tile_m == 0."""
    n_min = _round_up(max(n, 128), 128)
    steps = -(-n_min // max_tile)                 # ceil
    if even_steps:
        steps = max(2, steps)
        steps += steps % 2                        # keep both TCs busy on v7x
    tile = _round_up(-(-n_min // steps), 128)
    return tile, tile * steps


# ---------------------------------------------------------------------------
# Wrapper.
# ---------------------------------------------------------------------------
def kernel_inr_cord(cord, prepared, *, max_tile=8192):
    """Forward pass of KernelINR_Cord.

    cord:     (N, 2) coordinates (any N; padded internally).
    prepared: dict from prepare_params(): w1_aug (H,3), w2_aug (H,H+1),
              w3 (1,H) -- with w0 already folded in.
    returns   (N,) float32, matching `self.layers(cord).squeeze(-1)`.
    """
    N, two = cord.shape
    assert two == 2
    H = prepared["w3"].shape[1]

    tile_m, n_pad = _plan_tiles(N, max_tile=max_tile,
                                even_steps=_chip_has_two_tensorcores())
    grid = (n_pad // tile_m,)

    # Augmented, transposed coords: (3, n_pad); row 2 = 1.0 (layer-1 bias lane).
    # TODO(synk): callers that reuse coords should cache this pre-augmented
    # slab to skip the per-call transpose/pad round trip.
    cord_t = cord.astype(jnp.float32).T                        # (2, N)
    cord_aug = jnp.concatenate([cord_t, jnp.ones((1, N), jnp.float32)], axis=0)
    if n_pad != N:
        cord_aug = jnp.pad(cord_aug, ((0, 0), (0, n_pad - N)))

    weight_bytes = 4 * (H * 3 + H * (H + 1) + H)
    cost = pl.CostEstimate(
        flops=int(2 * n_pad * H * (H + 5) + 40 * n_pad * H),   # matmuls + poly sin
        transcendentals=0,
        bytes_accessed=int(4 * (3 * n_pad + n_pad) + weight_bytes),
    )

    out = pl.pallas_call(
        _mlp_kernel,
        out_shape=jax.ShapeDtypeStruct((1, n_pad), jnp.float32),
        grid_spec=pltpu.PrefetchScalarGridSpec(
            num_scalar_prefetch=0,
            grid=grid,
            in_specs=[
                pl.BlockSpec((3, tile_m), lambda i: (0, i)),      # cord tile
                pl.BlockSpec((H, 3), lambda i: (0, 0)),           # w1_aug
                pl.BlockSpec((H, H + 1), lambda i: (0, 0)),       # w2_aug
                pl.BlockSpec((1, H), lambda i: (0, 0)),           # w3
            ],
            out_specs=pl.BlockSpec((1, tile_m), lambda i: (0, i)),  # lane-dense
            scratch_shapes=[pltpu.VMEM((H + 1, tile_m), jnp.float32)],
        ),
        compiler_params=pltpu.CompilerParams(
            dimension_semantics=("parallel",),
            vmem_limit_bytes=48 * 1024 * 1024,   # headroom for 8192-pt tiles
        ),
        cost_estimate=cost,
    )(cord_aug, prepared["w1_aug"], prepared["w2_aug"], prepared["w3"])

    return out[0, :N]                            # squeeze(-1) + drop padding


# ---------------------------------------------------------------------------
# Parameters (PyTorch nn.Linear layout) and one-time prep.
# ---------------------------------------------------------------------------
def init_params(key, hidden_dim=64):
    k1, k2, k3, k4, k5 = jax.random.split(key, 5)

    def uni(k, shape, fan_in):
        bound = 1.0 / jnp.sqrt(fan_in)
        return jax.random.uniform(k, shape, jnp.float32, -bound, bound)

    return {
        "w1": uni(k1, (hidden_dim, 2), 2.0),
        "b1": uni(k2, (hidden_dim,), 2.0),
        "w2": uni(k3, (hidden_dim, hidden_dim), float(hidden_dim)),
        "b2": uni(k4, (hidden_dim,), float(hidden_dim)),
        "w3": uni(k5, (1, hidden_dim), float(hidden_dim)),
    }


def prepare_params(params, w0=1.0):
    """Fold w0 into the pre-sine layers and fold biases into augmented weight
    matrices for the (features, points) kernel layout."""
    H = params["w1"].shape[0]
    w1 = (w0 * params["w1"]).astype(jnp.float32)                    # (H, 2)
    b1 = (w0 * params["b1"]).reshape(H, 1).astype(jnp.float32)      # (H, 1)
    w2 = (w0 * params["w2"]).astype(jnp.float32)                    # (H, H)
    b2 = (w0 * params["b2"]).reshape(H, 1).astype(jnp.float32)      # (H, 1)
    return {
        "w1_aug": jnp.concatenate([w1, b1], axis=1),                # (H, 3)
        "w2_aug": jnp.concatenate([w2, b2], axis=1),                # (H, H+1)
        "w3": params["w3"].astype(jnp.float32),                     # (1, H)
    }


def reference_forward(cord, params, w0=1.0):
    """Pure-JAX reference in PyTorch layout (raw, unfolded params)."""
    h1 = jnp.sin(w0 * (cord @ params["w1"].T + params["b1"]))
    h2 = jnp.sin(w0 * (h1 @ params["w2"].T + params["b2"]))
    return (h2 @ params["w3"].T)[:, 0]


if __name__ == "__main__":
    key = jax.random.PRNGKey(0)
    k_params, k_cord = jax.random.split(key)

    hidden_dim = 64          # module default
    w0 = 1.0                 # module default

    raw_params = init_params(k_params, hidden_dim=hidden_dim)
    prepared = prepare_params(raw_params, w0=w0)   # one-time fold of w0 / biases

    fwd = jax.jit(lambda c: kernel_inr_cord(c, prepared))

    # Two cases: lane-aligned N and ragged N (padding path).
    for N in (512, 300):
        kc = jax.random.fold_in(k_cord, N)
        cord = jax.random.uniform(kc, (N, 2), jnp.float32, -1.0, 1.0)

        out = jax.block_until_ready(fwd(cord))
        ref = reference_forward(cord, raw_params, w0=w0)

        assert out.shape == (N,)
        err = jnp.max(jnp.abs(out - ref))
        assert jnp.allclose(out, ref, atol=1e-4, rtol=1e-4), (
            f"mismatch vs reference at N={N}: max abs err {err}")

    print("KERNEL_OK")
</pallas_src>

<mosaic_0001>
module attributes {stable_mosaic.version = 11 : i64} {
  func.func @_mlp_kernel(%arg0: i32, %arg1: memref<3x512xf32, #tpu.memory_space<vmem>>, %arg2: memref<64x3xf32, #tpu.memory_space<vmem>>, %arg3: memref<64x65xf32, #tpu.memory_space<vmem>>, %arg4: memref<1x64xf32, #tpu.memory_space<vmem>>, %arg5: memref<1x512xf32, #tpu.memory_space<vmem>>, %arg6: memref<65x512xf32, #tpu.memory_space<vmem>>) attributes {dimension_semantics = [#tpu.dimension_semantics<parallel>], iteration_bounds = array<i64: 1>, scalar_prefetch = 0 : i64, scratch_operands = 1 : i64, tpu.core_type = #tpu.core_type<tc>, window_params = [{transform_indices = @transform_0, window_bounds = array<i64: 3, 512>}, {pipeline_mode = #tpu.pipeline_mode<synchronous>, transform_indices = @transform_1, window_bounds = array<i64: 64, 3>}, {pipeline_mode = #tpu.pipeline_mode<synchronous>, transform_indices = @transform_2, window_bounds = array<i64: 64, 65>}, {pipeline_mode = #tpu.pipeline_mode<synchronous>, transform_indices = @transform_3, window_bounds = array<i64: 1, 64>}, {transform_indices = @transform_4, window_bounds = array<i64: 1, 512>}]} {
    %c0 = arith.constant 0 : index
    %c0_0 = arith.constant 0 : index
    %0 = vector.load %arg2[%c0, %c0_0] : memref<64x3xf32, #tpu.memory_space<vmem>>, vector<64x3xf32>
    %c0_1 = arith.constant 0 : index
    %c0_2 = arith.constant 0 : index
    %1 = vector.load %arg1[%c0_1, %c0_2] : memref<3x512xf32, #tpu.memory_space<vmem>>, vector<3x512xf32>
    %cst = arith.constant dense<0.000000e+00> : vector<64x512xf32>
    %2 = tpu.matmul %0, %1, %cst {dimension_numbers = #tpu.dot_dimension_numbers<[1], [0], [0], [1], [0, 0, 1, 1], [], []>} : vector<64x3xf32>, vector<3x512xf32>, vector<64x512xf32> -> vector<64x512xf32>
    %cst_3 = arith.constant 0.318309873 : f32
    %3 = vector.broadcast %cst_3 : f32 to vector<64x512xf32>
    %4 = arith.mulf %2, %3 : vector<64x512xf32>
    %cst_4 = arith.constant 5.000000e-01 : f32
    %5 = vector.broadcast %cst_4 : f32 to vector<64x512xf32>
    %6 = arith.addf %4, %5 : vector<64x512xf32>
    %7 = math.floor %6 : vector<64x512xf32>
    %cst_5 = arith.constant 3.140625 : f32
    %8 = vector.broadcast %cst_5 : f32 to vector<64x512xf32>
    %9 = arith.mulf %7, %8 : vector<64x512xf32>
    %10 = arith.subf %2, %9 : vector<64x512xf32>
    %cst_6 = arith.constant 9.67653584E-4 : f32
    %11 = vector.broadcast %cst_6 : f32 to vector<64x512xf32>
    %12 = arith.mulf %7, %11 : vector<64x512xf32>
    %13 = arith.subf %10, %12 : vector<64x512xf32>
    %cst_7 = arith.constant 5.000000e-01 : f32
    %14 = vector.broadcast %cst_7 : f32 to vector<64x512xf32>
    %15 = arith.mulf %7, %14 : vector<64x512xf32>
    %16 = math.floor %15 : vector<64x512xf32>
    %cst_8 = arith.constant 2.000000e+00 : f32
    %17 = vector.broadcast %cst_8 : f32 to vector<64x512xf32>
    %18 = arith.mulf %17, %16 : vector<64x512xf32>
    %19 = arith.subf %7, %18 : vector<64x512xf32>
    %cst_9 = arith.constant 2.000000e+00 : f32
    %20 = vector.broadcast %cst_9 : f32 to vector<64x512xf32>
    %21 = arith.mulf %20, %19 : vector<64x512xf32>
    %cst_10 = arith.constant 1.000000e+00 : f32
    %22 = vector.broadcast %cst_10 : f32 to vector<64x512xf32>
    %23 = arith.subf %22, %21 : vector<64x512xf32>
    %24 = arith.mulf %13, %13 : vector<64x512xf32>
    %cst_11 = arith.constant -2.50521079E-8 : f32
    %25 = vector.broadcast %cst_11 : f32 to vector<64x512xf32>
    %26 = arith.mulf %25, %24 : vector<64x512xf32>
    %cst_12 = arith.constant 2.75573188E-6 : f32
    %27 = vector.broadcast %cst_12 : f32 to vector<64x512xf32>
    %28 = arith.addf %26, %27 : vector<64x512xf32>
    %29 = arith.mulf %28, %24 : vector<64x512xf32>
    %cst_13 = arith.constant 1.98412701E-4 : f32
    %30 = vector.broadcast %cst_13 : f32 to vector<64x512xf32>
    %31 = arith.subf %29, %30 : vector<64x512xf32>
    %32 = arith.mulf %31, %24 : vector<64x512xf32>
    %cst_14 = arith.constant 0.00833333284 : f32
    %33 = vector.broadcast %cst_14 : f32 to vector<64x512xf32>
    %34 = arith.addf %32, %33 : vector<64x512xf32>
    %35 = arith.mulf %34, %24 : vector<64x512xf32>
    %cst_15 = arith.constant 0.166666672 : f32
    %36 = vector.broadcast %cst_15 : f32 to vector<64x512xf32>
    %37 = arith.subf %35, %36 : vector<64x512xf32>
    %38 = arith.mulf %37, %24 : vector<64x512xf32>
    %cst_16 = arith.constant 1.000000e+00 : f32
    %39 = vector.broadcast %cst_16 : f32 to vector<64x512xf32>
    %40 = arith.addf %38, %39 : vector<64x512xf32>
    %41 = arith.mulf %23, %13 : vector<64x512xf32>
    %42 = arith.mulf %41, %40 : vector<64x512xf32>
    %c0_17 = arith.constant 0 : index
    %c0_18 = arith.constant 0 : index
    %43 = vector.load %arg6[%c0_17, %c0_18] : memref<65x512xf32, #tpu.memory_space<vmem>>, vector<64x512xf32>
    tpu.vector_store %arg6[%c0_17, %c0_18], %42 {strides = array<i32>} : memref<65x512xf32, #tpu.memory_space<vmem>>, vector<64x512xf32>,
    %cst_19 = arith.constant 1.000000e+00 : f32
    %44 = vector.broadcast %cst_19 : f32 to vector<1x512xf32>
    %c64 = arith.constant 64 : index
    %c0_20 = arith.constant 0 : index
    %45 = vector.load %arg6[%c64, %c0_20] : memref<65x512xf32, #tpu.memory_space<vmem>>, vector<1x512xf32>
    tpu.vector_store %arg6[%c64, %c0_20], %44 {strides = array<i32>} : memref<65x512xf32, #tpu.memory_space<vmem>>, vector<1x512xf32>,
    %c0_21 = arith.constant 0 : index
    %c0_22 = arith.constant 0 : index
    %46 = vector.load %arg3[%c0_21, %c0_22] : memref<64x65xf32, #tpu.memory_space<vmem>>, vector<64x65xf32>
    %c0_23 = arith.constant 0 : index
    %c0_24 = arith.constant 0 : index
    %47 = vector.load %arg6[%c0_23, %c0_24] : memref<65x512xf32, #tpu.memory_space<vmem>>, vector<65x512xf32>
    %cst_25 = arith.constant dense<0.000000e+00> : vector<64x512xf32>
    %48 = tpu.matmul %46, %47, %cst_25 {dimension_numbers = #tpu.dot_dimension_numbers<[1], [0], [0], [1], [0, 0, 1, 1], [], []>} : vector<64x65xf32>, vector<65x512xf32>, vector<64x512xf32> -> vector<64x512xf32>
    %cst_26 = arith.constant 0.318309873 : f32
    %49 = vector.broadcast %cst_26 : f32 to vector<64x512xf32>
    %50 = arith.mulf %48, %49 : vector<64x512xf32>
    %cst_27 = arith.constant 5.000000e-01 : f32
    %51 = vector.broadcast %cst_27 : f32 to vector<64x512xf32>
    %52 = arith.addf %50, %51 : vector<64x512xf32>
    %53 = math.floor %52 : vector<64x512xf32>
    %cst_28 = arith.constant 3.140625 : f32
    %54 = vector.broadcast %cst_28 : f32 to vector<64x512xf32>
    %55 = arith.mulf %53, %54 : vector<64x512xf32>
    %56 = arith.subf %48, %55 : vector<64x512xf32>
    %cst_29 = arith.constant 9.67653584E-4 : f32
    %57 = vector.broadcast %cst_29 : f32 to vector<64x512xf32>
    %58 = arith.mulf %53, %57 : vector<64x512xf32>
    %59 = arith.subf %56, %58 : vector<64x512xf32>
    %cst_30 = arith.constant 5.000000e-01 : f32
    %60 = vector.broadcast %cst_30 : f32 to vector<64x512xf32>
    %61 = arith.mulf %53, %60 : vector<64x512xf32>
    %62 = math.floor %61 : vector<64x512xf32>
    %cst_31 = arith.constant 2.000000e+00 : f32
    %63 = vector.broadcast %cst_31 : f32 to vector<64x512xf32>
    %64 = arith.mulf %63, %62 : vector<64x512xf32>
    %65 = arith.subf %53, %64 : vector<64x512xf32>
    %cst_32 = arith.constant 2.000000e+00 : f32
    %66 = vector.broadcast %cst_32 : f32 to vector<64x512xf32>
    %67 = arith.mulf %66, %65 : vector<64x512xf32>
    %cst_33 = arith.constant 1.000000e+00 : f32
    %68 = vector.broadcast %cst_33 : f32 to vector<64x512xf32>
    %69 = arith.subf %68, %67 : vector<64x512xf32>
    %70 = arith.mulf %59, %59 : vector<64x512xf32>
    %cst_34 = arith.constant -2.50521079E-8 : f32
    %71 = vector.broadcast %cst_34 : f32 to vector<64x512xf32>
    %72 = arith.mulf %71, %70 : vector<64x512xf32>
    %cst_35 = arith.constant 2.75573188E-6 : f32
    %73 = vector.broadcast %cst_35 : f32 to vector<64x512xf32>
    %74 = arith.addf %72, %73 : vector<64x512xf32>
    %75 = arith.mulf %74, %70 : vector<64x512xf32>
    %cst_36 = arith.constant 1.98412701E-4 : f32
    %76 = vector.broadcast %cst_36 : f32 to vector<64x512xf32>
    %77 = arith.subf %75, %76 : vector<64x512xf32>
    %78 = arith.mulf %77, %70 : vector<64x512xf32>
    %cst_37 = arith.constant 0.00833333284 : f32
    %79 = vector.broadcast %cst_37 : f32 to vector<64x512xf32>
    %80 = arith.addf %78, %79 : vector<64x512xf32>
    %81 = arith.mulf %80, %70 : vector<64x512xf32>
    %cst_38 = arith.constant 0.166666672 : f32
    %82 = vector.broadcast %cst_38 : f32 to vector<64x512xf32>
    %83 = arith.subf %81, %82 : vector<64x512xf32>
    %84 = arith.mulf %83, %70 : vector<64x512xf32>
    %cst_39 = arith.constant 1.000000e+00 : f32
    %85 = vector.broadcast %cst_39 : f32 to vector<64x512xf32>
    %86 = arith.addf %84, %85 : vector<64x512xf32>
    %87 = arith.mulf %69, %59 : vector<64x512xf32>
    %88 = arith.mulf %87, %86 : vector<64x512xf32>
    %c0_40 = arith.constant 0 : index
    %c0_41 = arith.constant 0 : index
    %89 = vector.load %arg4[%c0_40, %c0_41] : memref<1x64xf32, #tpu.memory_space<vmem>>, vector<1x64xf32>
    %cst_42 = arith.constant dense<0.000000e+00> : vector<1x512xf32>
    %90 = tpu.matmul %89, %88, %cst_42 {dimension_numbers = #tpu.dot_dimension_numbers<[1], [0], [0], [1], [0, 0, 1, 1], [], []>} : vector<1x64xf32>, vector<64x512xf32>, vector<1x512xf32> -> vector<1x512xf32>
    %c0_43 = arith.constant 0 : index
    %c0_44 = arith.constant 0 : index
    %91 = vector.load %arg5[%c0_43, %c0_44] : memref<1x512xf32, #tpu.memory_space<vmem>>, vector<1x512xf32>
    tpu.vector_store %arg5[%c0_43, %c0_44], %90 {strides = array<i32>} : memref<1x512xf32, #tpu.memory_space<vmem>>, vector<1x512xf32>,
    return
  }
  func.func @transform_0(%arg0: i32) -> (i32, i32) {
    %c0_i32 = arith.constant 0 : i32
    %c0_i32_0 = arith.constant 0 : i32
    return %c0_i32, %arg0 : i32, i32
  }
  func.func @transform_1(%arg0: i32) -> (i32, i32) {
    %c0_i32 = arith.constant 0 : i32
    %c0_i32_0 = arith.constant 0 : i32
    %c0_i32_1 = arith.constant 0 : i32
    return %c0_i32, %c0_i32_0 : i32, i32
  }
  func.func @transform_2(%arg0: i32) -> (i32, i32) {
    %c0_i32 = arith.constant 0 : i32
    %c0_i32_0 = arith.constant 0 : i32
    %c0_i32_1 = arith.constant 0 : i32
    return %c0_i32, %c0_i32_0 : i32, i32
  }
  func.func @transform_3(%arg0: i32) -> (i32, i32) {
    %c0_i32 = arith.constant 0 : i32
    %c0_i32_0 = arith.constant 0 : i32
    %c0_i32_1 = arith.constant 0 : i32
    return %c0_i32, %c0_i32_0 : i32, i32
  }
  func.func @transform_4(%arg0: i32) -> (i32, i32) {
    %c0_i32 = arith.constant 0 : i32
    %c0_i32_0 = arith.constant 0 : i32
    return %c0_i32, %arg0 : i32, i32
  }
}

</mosaic_0001>

<llo_original>
// kernel: _lambda_.1
$region0: #{_lambda_.1}
  #allocation0 [shape = 'u32[]', space=smem, size = 0x4, offset = 0x4, fixed_abs, tag = 'smem constant byte address 0x4 - core index']
  #allocation1 [shape = 'u32[144,128]{1,0:T(1,128)}', space=vmem, size = 0x12000, scoped, tag = 'internal scratch']
  #allocation2 [shape = 'f32[65,512]{1,0:T(8,128)}', space=vmem, size = 0x24000, scoped, tag = 'scratch operand']
  %s0 = inlined_call_operand.vmem [shape: f32[3,512], index: 0, kind: input, shape index: {}]
  %s1 = inlined_call_operand.hbm [shape: f32[64,3], index: 1, kind: input, shape index: {}]
  %s2 = inlined_call_operand.hbm [shape: f32[64,65], index: 2, kind: input, shape index: {}]
  %s3 = inlined_call_operand.vmem [shape: f32[1,64], index: 3, kind: input, shape index: {}]
  %s4 = inlined_call_operand.hbm [shape: f32[1,512], index: 4, kind: output, shape index: {}]
  %s5 = sld [smem:[#allocation0]]
  $region34: #{_lambda_.1} parent=0
    _
  %s7 = ssub.s32 1, %s5
  %s8 = scalar_select 0, %s7, %s5
  $region1: #{_lambda_.1} parent=0
    #allocation3 [shape = 'u8[32768]{0}', space=vmem, size = 0x8000, scoped, tag = 'input window, operand 1, single buffered']
    #allocation4 [shape = 's32[1]{0}', space=sflag, size = 0x4, scoped, tag = 'scoped memory for _lambda_.1']
    #allocation5 [shape = 's32[1]{0}', space=sflag, size = 0x4, scoped, tag = 'scoped memory for _lambda_.1']
    #allocation6 [shape = 'u8[32768]{0}', space=vmem, size = 0x8000, scoped, tag = 'input window, operand 2, single buffered']
    #allocation7 [shape = 's32[1]{0}', space=sflag, size = 0x4, scoped, tag = 'scoped memory for _lambda_.1']
    #allocation8 [shape = 'u8[2048]{0}', space=vmem, size = 0x800, scoped, tag = 'output window, operand 0, single buffered']
    %9 = vsyncpa [#allocation4], 0
    %10 = vsyncpa [#allocation7], 0
    %11 = vsyncpa [#allocation5], 0
    // Predicated region
    $region2: #{_lambda_.1} parent=1 // pred_check
      _
    $region3: #{_lambda_.1} parent=1 // pred_check_branch
      %13 = sbr.rel (0) target = $region5
    $region4: #{_lambda_.1} parent=1 // pred_region
      _
    $region5: #{_lambda_.1} parent=1 // pred_fallthru
      _
    // Predicated region
    $region6: #{_lambda_.1} parent=1 // pred_check
      _
    $region7: #{_lambda_.1} parent=1 // pred_check_branch
      %15 = sbr.rel (0) target = $region9
    $region8: #{_lambda_.1} parent=1 // pred_region
      %s17 = ssub.s32 1024, 1024
      %18 = vsyncadd [#allocation4], %s17
      %s19 = sshll.u32 [#allocation3], 4
      %s20 = int_to_ptr.vmem [resolvable:$true] %s19
      %25 = dma.hbm_to_vmem [thread:$0]  %s1, 1024, %s20, [#allocation4], 128, 128, 8
    $region9: #{_lambda_.1} parent=1 // pred_fallthru
      _
    // Predicated region
    $region10: #{_lambda_.1} parent=1 // pred_check
      _
    $region11: #{_lambda_.1} parent=1 // pred_check_branch
      %27 = sbr.rel (0) target = $region13
    $region12: #{_lambda_.1} parent=1 // pred_region
      %s29 = ssub.s32 1024, 1024
      %30 = vsyncadd [#allocation7], %s29
      %s31 = sshll.u32 [#allocation6], 4
      %s32 = int_to_ptr.vmem [resolvable:$true] %s31
      %37 = dma.hbm_to_vmem [thread:$0]  %s2, 1024, %s32, [#allocation7], 128, 128, 8
    $region13: #{_lambda_.1} parent=1 // pred_fallthru
      _
    // Predicated region
    $region14: #{_lambda_.1} parent=1 // pred_check
      _
    $region15: #{_lambda_.1} parent=1 // pred_check_branch
      %39 = sbr.rel (0) target = $region17
    $region16: #{_lambda_.1} parent=1 // pred_region
      _
    $region17: #{_lambda_.1} parent=1 // pred_fallthru
      _
    // Predicated region
    $region18: #{_lambda_.1} parent=1 // pred_check
      _
    $region19: #{_lambda_.1} parent=1 // pred_check_branch
      %41 = sbr.rel (0) target = $region21
    $region20: #{_lambda_.1} parent=1 // pred_region
      %42 = dma.done [#allocation4], 1024
    $region21: #{_lambda_.1} parent=1 // pred_fallthru
      _
    // Predicated region
    $region22: #{_lambda_.1} parent=1 // pred_check
      _
    $region23: #{_lambda_.1} parent=1 // pred_check_branch
      %44 = sbr.rel (0) target = $region25
    $region24: #{_lambda_.1} parent=1 // pred_region
      %45 = dma.done [#allocation7], 1024
    $region25: #{_lambda_.1} parent=1 // pred_fallthru
      _
    %v46 = vld [vmem:[#allocation3] sm:$0xff]
    %v47 = vld [vmem:[#allocation3 + $0x8] sm:$0xff]
    %v48 = vld [vmem:[#allocation3 + $0x10] sm:$0xff]
    %v49 = vld [vmem:[#allocation3 + $0x18] sm:$0xff]
    %v50 = vld [vmem:[#allocation3 + $0x20] sm:$0xff]
    %v51 = vld [vmem:[#allocation3 + $0x28] sm:$0xff]
    %v52 = vld [vmem:[#allocation3 + $0x30] sm:$0xff]
    %v53 = vld [vmem:[#allocation3 + $0x38] sm:$0xff]
    %v54 = vld [vmem:[%s0] sm:$0x77]
    %v55 = vld [vmem:[%s0 + $0x8] sm:$0x77]
    %v58 = vcombine.high %v54, %v54
    %v59 = vcombine.high %v55, %v55
    %vm60 = vcmask 23552
    %v62 = vsel %vm60, %v46, 0
    %v65 = vsel %vm60, %v47, 0
    %v68 = vsel %vm60, %v48, 0
    %v71 = vsel %vm60, %v49, 0
    %v74 = vsel %vm60, %v50, 0
    %v77 = vsel %vm60, %v51, 0
    %v80 = vsel %vm60, %v52, 0
    %v83 = vsel %vm60, %v53, 0
    %vm85 = vcmask 1042432
    %v86 = vsel %vm85, %v54, 0
    %v88 = vsel %vm85, %v58, 0
    %v90 = vsel %vm85, %v55, 0
    %v92 = vsel %vm85, %v59, 0
    %94 = vmatprep.subr.mxu0 %v88
    %95 = vmatpush1.msra.mxu0 %v86
    %96 = vmatprep.subr.mxu0 0.0
    %97 = vmatpush1.msra.mxu0 0.0
    %98 = vmatprep.subr.mxu0 0.0
    %99 = vmatpush1.msra.mxu0 0.0
    %100 = vmatprep.subr.mxu0 0.0
    %101 = vmatpush1.msra.mxu0 0.0
    %102 = vmatprep.subr.mxu0 0.0
    %103 = vmatpush1.msra.mxu0 0.0
    %104 = vmatprep.subr.mxu0 0.0
    %105 = vmatpush1.msra.mxu0 0.0
    %106 = vmatprep.subr.mxu0 0.0
    %107 = vmatpush1.msra.mxu0 0.0
    %108 = vmatprep.subr.mxu0 0.0
    %109 = vmatpush1.msra.mxu0 0.0
    %110 = vmatprep.subr.mxu0 0.0
    %111 = vmatpush1.msra.mxu0 0.0
    %112 = vmatprep.subr.mxu0 0.0
    %113 = vmatpush1.msra.mxu0 0.0
    %114 = vmatprep.subr.mxu0 0.0
    %115 = vmatpush1.msra.mxu0 0.0
    %116 = vmatprep.subr.mxu0 0.0
    %117 = vmatpush1.msra.mxu0 0.0
    %118 = vmatprep.subr.mxu0 0.0
    %119 = vmatpush1.msra.mxu0 0.0
    %120 = vmatprep.subr.mxu0 0.0
    %121 = vmatpush1.msra.mxu0 0.0
    %122 = vmatprep.subr.mxu0 0.0
    %123 = vmatpush1.msra.mxu0 0.0
    %124 = vmatprep.subr.mxu0 0.0
    %125 = vmatpush1.msra.mxu0 0.0
    %126 = vmatprep.subr.mxu0 0.0
    %127 = vmatpush1.msra.mxu0 0.0
    %128 = vmatprep.subr.mxu0 0.0
    %129 = vmatpush1.msra.mxu0 0.0
    %130 = vmatprep.subr.mxu0 0.0
    %131 = vmatpush1.msra.mxu0 0.0
    %132 = vmatprep.subr.mxu0 0.0
    %133 = vmatpush1.msra.mxu0 0.0
    %134 = vmatprep.subr.mxu0 0.0
    %135 = vmatpush1.msra.mxu0 0.0
    %136 = vmatprep.subr.mxu0 0.0
    %137 = vmatpush1.msra.mxu0 0.0
    %138 = vmatprep.subr.mxu0 0.0
    %139 = vmatpush1.msra.mxu0 0.0
    %140 = vmatprep.subr.mxu0 0.0
    %141 = vmatpush1.msra.mxu0 0.0
    %142 = vmatprep.subr.mxu0 0.0
    %143 = vmatpush1.msra.mxu0 0.0
    %144 = vmatprep.subr.mxu0 0.0
    %145 = vmatpush1.msra.mxu0 0.0
    %146 = vmatprep.subr.mxu0 0.0
    %147 = vmatpush1.msra.mxu0 0.0
    %148 = vmatprep.subr.mxu0 0.0
    %149 = vmatpush1.msra.mxu0 0.0
    %150 = vmatprep.subr.mxu0 0.0
    %151 = vmatpush1.msra.mxu0 0.0
    %152 = vmatprep.subr.mxu0 0.0
    %153 = vmatpush1.msra.mxu0 0.0
    %154 = vmatprep.subr.mxu0 0.0
    %155 = vmatpush1.msra.mxu0 0.0
    %156 = vmatprep.subr.mxu0 0.0
    %157 = vmatpush1.msra.mxu0 0.0
    %158 = vmatprep.mubr.f32.mxu0 0.0
    %159 = vmatmul.mubr.f32.gmra.mrb[0].mxu0 %v62
    %v160 = vpop.f32.mrb[0].mxu0
    %v161 = vadd.f32 0.0, %v160
    %v162 = vpop.f32.mrb[0].mxu0
    %v163 = vadd.f32 0.0, %v162
    %164 = vmatprep.mubr.f32.mxu0 0.0
    %165 = vmatmul.mubr.f32.gmra.mrb[0].mxu0 %v65
    %v166 = vpop.f32.mrb[0].mxu0
    %v167 = vadd.f32 0.0, %v166
    %v168 = vpop.f32.mrb[0].mxu0
    %v169 = vadd.f32 0.0, %v168
    %170 = vmatprep.mubr.f32.mxu0 0.0
    %171 = vmatmul.mubr.f32.gmra.mrb[0].mxu0 %v68
    %v172 = vpop.f32.mrb[0].mxu0
    %v173 = vadd.f32 0.0, %v172
    %v174 = vpop.f32.mrb[0].mxu0
    %v175 = vadd.f32 0.0, %v174
    %176 = vmatprep.mubr.f32.mxu0 0.0
    %177 = vmatmul.mubr.f32.gmra.mrb[0].mxu0 %v71
    %v178 = vpop.f32.mrb[0].mxu0
    %v179 = vadd.f32 0.0, %v178
    %v180 = vpop.f32.mrb[0].mxu0
    %v181 = vadd.f32 0.0, %v180
    %182 = vmatprep.mubr.f32.mxu0 0.0
    %183 = vmatmul.mubr.f32.gmra.mrb[0].mxu0 %v74
    %v184 = vpop.f32.mrb[0].mxu0
    %v185 = vadd.f32 0.0, %v184
    %v186 = vpop.f32.mrb[0].mxu0
    %v187 = vadd.f32 0.0, %v186
    %188 = vmatprep.mubr.f32.mxu0 0.0
    %189 = vmatmul.mubr.f32.gmra.mrb[0].mxu0 %v77
    %v190 = vpop.f32.mrb[0].mxu0
    %v191 = vadd.f32 0.0, %v190
    %v192 = vpop.f32.mrb[0].mxu0
    %v193 = vadd.f32 0.0, %v192
    %194 = vmatprep.mubr.f32.mxu0 0.0
    %195 = vmatmul.mubr.f32.gmra.mrb[0].mxu0 %v80
    %v196 = vpop.f32.mrb[0].mxu0
    %v197 = vadd.f32 0.0, %v196
    %v198 = vpop.f32.mrb[0].mxu0
    %v199 = vadd.f32 0.0, %v198
    %200 = vmatprep.mubr.f32.mxu0 0.0
    %201 = vmatmul.mubr.f32.gmra.mrb[0].mxu0 %v83
    %v202 = vpop.f32.mrb[0].mxu0
    %v203 = vadd.f32 0.0, %v202
    %v204 = vpop.f32.mrb[0].mxu0
    %v205 = vadd.f32 0.0, %v204
    %206 = vdwg.mxu0
    %207 = vmatprep.subr.mxu0 %v92
    %208 = vmatpush1.msra.mxu0 %v90
    %209 = vmatprep.subr.mxu0 0.0
    %210 = vmatpush1.msra.mxu0 0.0
    %211 = vmatprep.subr.mxu0 0.0
    %212 = vmatpush1.msra.mxu0 0.0
    %213 = vmatprep.subr.mxu0 0.0
    %214 = vmatpush1.msra.mxu0 0.0
    %215 = vmatprep.subr.mxu0 0.0
    %216 = vmatpush1.msra.mxu0 0.0
    %217 = vmatprep.subr.mxu0 0.0
    %218 = vmatpush1.msra.mxu0 0.0
    %219 = vmatprep.subr.mxu0 0.0
    %220 = vmatpush1.msra.mxu0 0.0
    %221 = vmatprep.subr.mxu0 0.0
    %222 = vmatpush1.msra.mxu0 0.0
    %223 = vmatprep.subr.mxu0 0.0
    %224 = vmatpush1.msra.mxu0 0.0
    %225 = vmatprep.subr.mxu0 0.0
    %226 = vmatpush1.msra.mxu0 0.0
    %227 = vmatprep.subr.mxu0 0.0
    %228 = vmatpush1.msra.mxu0 0.0
    %229 = vmatprep.subr.mxu0 0.0
    %230 = vmatpush1.msra.mxu0 0.0
    %231 = vmatprep.subr.mxu0 0.0
    %232 = vmatpush1.msra.mxu0 0.0
    %233 = vmatprep.subr.mxu0 0.0
    %234 = vmatpush1.msra.mxu0 0.0
    %235 = vmatprep.subr.mxu0 0.0
    %236 = vmatpush1.msra.mxu0 0.0
    %237 = vmatprep.subr.mxu0 0.0
    %238 = vmatpush1.msra.mxu0 0.0
    %239 = vmatprep.subr.mxu0 0.0
    %240 = vmatpush1.msra.mxu0 0.0
    %241 = vmatprep.subr.mxu0 0.0
    %242 = vmatpush1.msra.mxu0 0.0
    %243 = vmatprep.subr.mxu0 0.0
    %244 = vmatpush1.msra.mxu0 0.0
    %245 = vmatprep.subr.mxu0 0.0
    %246 = vmatpush1.msra.mxu0 0.0
    %247 = vmatprep.subr.mxu0 0.0
    %248 = vmatpush1.msra.mxu0 0.0
    %249 = vmatprep.subr.mxu0 0.0
    %250 = vmatpush1.msra.mxu0 0.0
    %251 = vmatprep.subr.mxu0 0.0
    %252 = vmatpush1.msra.mxu0 0.0
    %253 = vmatprep.subr.mxu0 0.0
    %254 = vmatpush1.msra.mxu0 0.0
    %255 = vmatprep.subr.mxu0 0.0
    %256 = vmatpush1.msra.mxu0 0.0
    %257 = vmatprep.subr.mxu0 0.0
    %258 = vmatpush1.msra.mxu0 0.0
    %259 = vmatprep.subr.mxu0 0.0
    %260 = vmatpush1.msra.mxu0 0.0
    %261 = vmatprep.subr.mxu0 0.0
    %262 = vmatpush1.msra.mxu0 0.0
    %263 = vmatprep.subr.mxu0 0.0
    %264 = vmatpush1.msra.mxu0 0.0
    %265 = vmatprep.subr.mxu0 0.0
    %266 = vmatpush1.msra.mxu0 0.0
    %267 = vmatprep.subr.mxu0 0.0
    %268 = vmatpush1.msra.mxu0 0.0
    %269 = vmatprep.subr.mxu0 0.0
    %270 = vmatpush1.msra.mxu0 0.0
    %271 = vmatprep.mubr.f32.mxu0 0.0
    %272 = vmatmul.mubr.f32.gmra.mrb[0].mxu0 %v62
    %v273 = vpop.f32.mrb[0].mxu0
    %v274 = vadd.f32 0.0, %v273
    %v275 = vpop.f32.mrb[0].mxu0
    %v276 = vadd.f32 0.0, %v275
    %277 = vmatprep.mubr.f32.mxu0 0.0
    %278 = vmatmul.mubr.f32.gmra.mrb[0].mxu0 %v65
    %v279 = vpop.f32.mrb[0].mxu0
    %v280 = vadd.f32 0.0, %v279
    %v281 = vpop.f32.mrb[0].mxu0
    %v282 = vadd.f32 0.0, %v281
    %283 = vmatprep.mubr.f32.mxu0 0.0
    %284 = vmatmul.mubr.f32.gmra.mrb[0].mxu0 %v68
    %v285 = vpop.f32.mrb[0].mxu0
    %v286 = vadd.f32 0.0, %v285
    %v287 = vpop.f32.mrb[0].mxu0
    %v288 = vadd.f32 0.0, %v287
    %289 = vmatprep.mubr.f32.mxu0 0.0
    %290 = vmatmul.mubr.f32.gmra.mrb[0].mxu0 %v71
    %v291 = vpop.f32.mrb[0].mxu0
    %v292 = vadd.f32 0.0, %v291
    %v293 = vpop.f32.mrb[0].mxu0
    %v294 = vadd.f32 0.0, %v293
    %295 = vmatprep.mubr.f32.mxu0 0.0
    %296 = vmatmul.mubr.f32.gmra.mrb[0].mxu0 %v74
    %v297 = vpop.f32.mrb[0].mxu0
    %v298 = vadd.f32 0.0, %v297
    %v299 = vpop.f32.mrb[0].mxu0
    %v300 = vadd.f32 0.0, %v299
    %301 = vmatprep.mubr.f32.mxu0 0.0
    %302 = vmatmul.mubr.f32.gmra.mrb[0].mxu0 %v77
    %v303 = vpop.f32.mrb[0].mxu0
    %v304 = vadd.f32 0.0, %v303
    %v305 = vpop.f32.mrb[0].mxu0
    %v306 = vadd.f32 0.0, %v305
    %307 = vmatprep.mubr.f32.mxu0 0.0
    %308 = vmatmul.mubr.f32.gmra.mrb[0].mxu0 %v80
    %v309 = vpop.f32.mrb[0].mxu0
    %v310 = vadd.f32 0.0, %v309
    %v311 = vpop.f32.mrb[0].mxu0
    %v312 = vadd.f32 0.0, %v311
    %313 = vmatprep.mubr.f32.mxu0 0.0
    %314 = vmatmul.mubr.f32.gmra.mrb[0].mxu0 %v83
    %v315 = vpop.f32.mrb[0].mxu0
    %v316 = vadd.f32 0.0, %v315
    %v317 = vpop.f32.mrb[0].mxu0
    %v318 = vadd.f32 0.0, %v317
    %319 = vdwg.mxu0
    %v320 = vmul.f32 %v161, 0.31830987
    %v321 = vmul.f32 %v163, 0.31830987
    %v322 = vmul.f32 %v274, 0.31830987
    %v323 = vmul.f32 %v276, 0.31830987
    %v324 = vmul.f32 %v167, 0.31830987
    %v325 = vmul.f32 %v169, 0.31830987
    %v326 = vmul.f32 %v280, 0.31830987
    %v327 = vmul.f32 %v282, 0.31830987
    %v328 = vmul.f32 %v173, 0.31830987
    %v329 = vmul.f32 %v175, 0.31830987
    %v330 = vmul.f32 %v286, 0.31830987
    %v331 = vmul.f32 %v288, 0.31830987
    %v332 = vmul.f32 %v179, 0.31830987
    %v333 = vmul.f32 %v181, 0.31830987
    %v334 = vmul.f32 %v292, 0.31830987
    %v335 = vmul.f32 %v294, 0.31830987
    %v336 = vmul.f32 %v185, 0.31830987
    %v337 = vmul.f32 %v187, 0.31830987
    %v338 = vmul.f32 %v298, 0.31830987
    %v339 = vmul.f32 %v300, 0.31830987
    %v340 = vmul.f32 %v191, 0.31830987
    %v341 = vmul.f32 %v193, 0.31830987
    %v342 = vmul.f32 %v304, 0.31830987
    %v343 = vmul.f32 %v306, 0.31830987
    %v344 = vmul.f32 %v197, 0.31830987
    %v345 = vmul.f32 %v199, 0.31830987
    %v346 = vmul.f32 %v310, 0.31830987
    %v347 = vmul.f32 %v312, 0.31830987
    %v348 = vmul.f32 %v203, 0.31830987
    %v349 = vmul.f32 %v205, 0.31830987
    %v350 = vmul.f32 %v316, 0.31830987
    %v351 = vmul.f32 %v318, 0.31830987
    %v352 = vadd.f32 %v320, 0.5
    %v353 = vadd.f32 %v321, 0.5
    %v354 = vadd.f32 %v322, 0.5
    %v355 = vadd.f32 %v323, 0.5
    %v356 = vadd.f32 %v324, 0.5
    %v357 = vadd.f32 %v325, 0.5
    %v358 = vadd.f32 %v326, 0.5
    %v359 = vadd.f32 %v327, 0.5
    %v360 = vadd.f32 %v328, 0.5
    %v361 = vadd.f32 %v329, 0.5
    %v362 = vadd.f32 %v330, 0.5
    %v363 = vadd.f32 %v331, 0.5
    %v364 = vadd.f32 %v332, 0.5
    %v365 = vadd.f32 %v333, 0.5
    %v366 = vadd.f32 %v334, 0.5
    %v367 = vadd.f32 %v335, 0.5
    %v368 = vadd.f32 %v336, 0.5
    %v369 = vadd.f32 %v337, 0.5
    %v370 = vadd.f32 %v338, 0.5
    %v371 = vadd.f32 %v339, 0.5
    %v372 = vadd.f32 %v340, 0.5
    %v373 = vadd.f32 %v341, 0.5
    %v374 = vadd.f32 %v342, 0.5
    %v375 = vadd.f32 %v343, 0.5
    %v376 = vadd.f32 %v344, 0.5
    %v377 = vadd.f32 %v345, 0.5
    %v378 = vadd.f32 %v346, 0.5
    %v379 = vadd.f32 %v347, 0.5
    %v380 = vadd.f32 %v348, 0.5
    %v381 = vadd.f32 %v349, 0.5
    %v382 = vadd.f32 %v350, 0.5
    %v383 = vadd.f32 %v351, 0.5
    %v384 = vfloor.f32 %v352
    %v385 = vfloor.f32 %v353
    %v386 = vfloor.f32 %v354
    %v387 = vfloor.f32 %v355
    %v388 = vfloor.f32 %v356
    %v389 = vfloor.f32 %v357
    %v390 = vfloor.f32 %v358
    %v391 = vfloor.f32 %v359
    %v392 = vfloor.f32 %v360
    %v393 = vfloor.f32 %v361
    %v394 = vfloor.f32 %v362
    %v395 = vfloor.f32 %v363
    %v396 = vfloor.f32 %v364
    %v397 = vfloor.f32 %v365
    %v398 = vfloor.f32 %v366
    %v399 = vfloor.f32 %v367
    %v400 = vfloor.f32 %v368
    %v401 = vfloor.f32 %v369
    %v402 = vfloor.f32 %v370
    %v403 = vfloor.f32 %v371
    %v404 = vfloor.f32 %v372
    %v405 = vfloor.f32 %v373
    %v406 = vfloor.f32 %v374
    %v407 = vfloor.f32 %v375
    %v408 = vfloor.f32 %v376
    %v409 = vfloor.f32 %v377
    %v410 = vfloor.f32 %v378
    %v411 = vfloor.f32 %v379
    %v412 = vfloor.f32 %v380
    %v413 = vfloor.f32 %v381
    %v414 = vfloor.f32 %v382
    %v415 = vfloor.f32 %v383
    %v416 = vmul.f32 %v384, 3.140625
    %v417 = vmul.f32 %v385, 3.140625
    %v418 = vmul.f32 %v386, 3.140625
    %v419 = vmul.f32 %v387, 3.140625
    %v420 = vmul.f32 %v388, 3.140625
    %v421 = vmul.f32 %v389, 3.140625
    %v422 = vmul.f32 %v390, 3.140625
    %v423 = vmul.f32 %v391, 3.140625
    %v424 = vmul.f32 %v392, 3.140625
    %v425 = vmul.f32 %v393, 3.140625
    %v426 = vmul.f32 %v394, 3.140625
    %v427 = vmul.f32 %v395, 3.140625
    %v428 = vmul.f32 %v396, 3.140625
    %v429 = vmul.f32 %v397, 3.140625
    %v430 = vmul.f32 %v398, 3.140625
    %v431 = vmul.f32 %v399, 3.140625
    %v432 = vmul.f32 %v400, 3.140625
    %v433 = vmul.f32 %v401, 3.140625
    %v434 = vmul.f32 %v402, 3.140625
    %v435 = vmul.f32 %v403, 3.140625
    %v436 = vmul.f32 %v404, 3.140625
    %v437 = vmul.f32 %v405, 3.140625
    %v438 = vmul.f32 %v406, 3.140625
    %v439 = vmul.f32 %v407, 3.140625
    %v440 = vmul.f32 %v408, 3.140625
    %v441 = vmul.f32 %v409, 3.140625
    %v442 = vmul.f32 %v410, 3.140625
    %v443 = vmul.f32 %v411, 3.140625
    %v444 = vmul.f32 %v412, 3.140625
    %v445 = vmul.f32 %v413, 3.140625
    %v446 = vmul.f32 %v414, 3.140625
    %v447 = vmul.f32 %v415, 3.140625
    %v448 = vsub.f32 %v161, %v416
    %v449 = vsub.f32 %v163, %v417
    %v450 = vsub.f32 %v274, %v418
    %v451 = vsub.f32 %v276, %v419
    %v452 = vsub.f32 %v167, %v420
    %v453 = vsub.f32 %v169, %v421
    %v454 = vsub.f32 %v280, %v422
    %v455 = vsub.f32 %v282, %v423
    %v456 = vsub.f32 %v173, %v424
    %v457 = vsub.f32 %v175, %v425
    %v458 = vsub.f32 %v286, %v426
    %v459 = vsub.f32 %v288, %v427
    %v460 = vsub.f32 %v179, %v428
    %v461 = vsub.f32 %v181, %v429
    %v462 = vsub.f32 %v292, %v430
    %v463 = vsub.f32 %v294, %v431
    %v464 = vsub.f32 %v185, %v432
    %v465 = vsub.f32 %v187, %v433
    %v466 = vsub.f32 %v298, %v434
    %v467 = vsub.f32 %v300, %v435
    %v468 = vsub.f32 %v191, %v436
    %v469 = vsub.f32 %v193, %v437
    %v470 = vsub.f32 %v304, %v438
    %v471 = vsub.f32 %v306, %v439
    %v472 = vsub.f32 %v197, %v440
    %v473 = vsub.f32 %v199, %v441
    %v474 = vsub.f32 %v310, %v442
    %v475 = vsub.f32 %v312, %v443
    %v476 = vsub.f32 %v203, %v444
    %v477 = vsub.f32 %v205, %v445
    %v478 = vsub.f32 %v316, %v446
    %v479 = vsub.f32 %v318, %v447
    %v480 = vmul.f32 %v384, 0.0009676536
    %v481 = vmul.f32 %v385, 0.0009676536
    %v482 = vmul.f32 %v386, 0.0009676536
    %v483 = vmul.f32 %v387, 0.0009676536
    %v484 = vmul.f32 %v388, 0.0009676536
    %v485 = vmul.f32 %v389, 0.0009676536
    %v486 = vmul.f32 %v390, 0.0009676536
    %v487 = vmul.f32 %v391, 0.0009676536
    %v488 = vmul.f32 %v392, 0.0009676536
    %v489 = vmul.f32 %v393, 0.0009676536
    %v490 = vmul.f32 %v394, 0.0009676536
    %v491 = vmul.f32 %v395, 0.0009676536
    %v492 = vmul.f32 %v396, 0.0009676536
    %v493 = vmul.f32 %v397, 0.0009676536
    %v494 = vmul.f32 %v398, 0.0009676536
    %v495 = vmul.f32 %v399, 0.0009676536
    %v496 = vmul.f32 %v400, 0.0009676536
    %v497 = vmul.f32 %v401, 0.0009676536
    %v498 = vmul.f32 %v402, 0.0009676536
    %v499 = vmul.f32 %v403, 0.0009676536
    %v500 = vmul.f32 %v404, 0.0009676536
    %v501 = vmul.f32 %v405, 0.0009676536
    %v502 = vmul.f32 %v406, 0.0009676536
    %v503 = vmul.f32 %v407, 0.0009676536
    %v504 = vmul.f32 %v408, 0.0009676536
    %v505 = vmul.f32 %v409, 0.0009676536
    %v506 = vmul.f32 %v410, 0.0009676536
    %v507 = vmul.f32 %v411, 0.0009676536
    %v508 = vmul.f32 %v412, 0.0009676536
    %v509 = vmul.f32 %v413, 0.0009676536
    %v510 = vmul.f32 %v414, 0.0009676536
    %v511 = vmul.f32 %v415, 0.0009676536
    %v512 = vsub.f32 %v448, %v480
    %v513 = vsub.f32 %v449, %v481
    %v514 = vsub.f32 %v450, %v482
    %v515 = vsub.f32 %v451, %v483
    %v516 = vsub.f32 %v452, %v484
    %v517 = vsub.f32 %v453, %v485
    %v518 = vsub.f32 %v454, %v486
    %v519 = vsub.f32 %v455, %v487
    %v520 = vsub.f32 %v456, %v488
    %v521 = vsub.f32 %v457, %v489
    %v522 = vsub.f32 %v458, %v490
    %v523 = vsub.f32 %v459, %v491
    %v524 = vsub.f32 %v460, %v492
    %v525 = vsub.f32 %v461, %v493
    %v526 = vsub.f32 %v462, %v494
    %v527 = vsub.f32 %v463, %v495
    %v528 = vsub.f32 %v464, %v496
    %v529 = vsub.f32 %v465, %v497
    %v530 = vsub.f32 %v466, %v498
    %v531 = vsub.f32 %v467, %v499
    %v532 = vsub.f32 %v468, %v500
    %v533 = vsub.f32 %v469, %v501
    %v534 = vsub.f32 %v470, %v502
    %v535 = vsub.f32 %v471, %v503
    %v536 = vsub.f32 %v472, %v504
    %v537 = vsub.f32 %v473, %v505
    %v538 = vsub.f32 %v474, %v506
    %v539 = vsub.f32 %v475, %v507
    %v540 = vsub.f32 %v476, %v508
    %v541 = vsub.f32 %v477, %v509
    %v542 = vsub.f32 %v478, %v510
    %v543 = vsub.f32 %v479, %v511
    %v544 = vmul.f32 %v384, 0.5
    %v545 = vmul.f32 %v385, 0.5
    %v546 = vmul.f32 %v386, 0.5
    %v547 = vmul.f32 %v387, 0.5
    %v548 = vmul.f32 %v388, 0.5
    %v549 = vmul.f32 %v389, 0.5
    %v550 = vmul.f32 %v390, 0.5
    %v551 = vmul.f32 %v391, 0.5
    %v552 = vmul.f32 %v392, 0.5
    %v553 = vmul.f32 %v393, 0.5
    %v554 = vmul.f32 %v394, 0.5
    %v555 = vmul.f32 %v395, 0.5
    %v556 = vmul.f32 %v396, 0.5
    %v557 = vmul.f32 %v397, 0.5
    %v558 = vmul.f32 %v398, 0.5
    %v559 = vmul.f32 %v399, 0.5
    %v560 = vmul.f32 %v400, 0.5
    %v561 = vmul.f32 %v401, 0.5
    %v562 = vmul.f32 %v402, 0.5
    %v563 = vmul.f32 %v403, 0.5
    %v564 = vmul.f32 %v404, 0.5
    %v565 = vmul.f32 %v405, 0.5
    %v566 = vmul.f32 %v406, 0.5
    %v567 = vmul.f32 %v407, 0.5
    %v568 = vmul.f32 %v408, 0.5
    %v569 = vmul.f32 %v409, 0.5
    %v570 = vmul.f32 %v410, 0.5
    %v571 = vmul.f32 %v411, 0.5
    %v572 = vmul.f32 %v412, 0.5
    %v573 = vmul.f32 %v413, 0.5
    %v574 = vmul.f32 %v414, 0.5
    %v575 = vmul.f32 %v415, 0.5
    %v576 = vfloor.f32 %v544
    %v577 = vfloor.f32 %v545
    %v578 = vfloor.f32 %v546
    %v579 = vfloor.f32 %v547
    %v580 = vfloor.f32 %v548
    %v581 = vfloor.f32 %v549
    %v582 = vfloor.f32 %v550
    %v583 = vfloor.f32 %v551
    %v584 = vfloor.f32 %v552
    %v585 = vfloor.f32 %v553
    %v586 = vfloor.f32 %v554
    %v587 = vfloor.f32 %v555
    %v588 = vfloor.f32 %v556
    %v589 = vfloor.f32 %v557
    %v590 = vfloor.f32 %v558
    %v591 = vfloor.f32 %v559
    %v592 = vfloor.f32 %v560
    %v593 = vfloor.f32 %v561
    %v594 = vfloor.f32 %v562
    %v595 = vfloor.f32 %v563
    %v596 = vfloor.f32 %v564
    %v597 = vfloor.f32 %v565
    %v598 = vfloor.f32 %v566
    %v599 = vfloor.f32 %v567
    %v600 = vfloor.f32 %v568
    %v601 = vfloor.f32 %v569
    %v602 = vfloor.f32 %v570
    %v603 = vfloor.f32 %v571
    %v604 = vfloor.f32 %v572
    %v605 = vfloor.f32 %v573
    %v606 = vfloor.f32 %v574
    %v607 = vfloor.f32 %v575
    %v608 = vmul.f32 %v576, 2.0
    %v609 = vmul.f32 %v577, 2.0
    %v610 = vmul.f32 %v578, 2.0
    %v611 = vmul.f32 %v579, 2.0
    %v612 = vmul.f32 %v580, 2.0
    %v613 = vmul.f32 %v581, 2.0
    %v614 = vmul.f32 %v582, 2.0
    %v615 = vmul.f32 %v583, 2.0
    %v616 = vmul.f32 %v584, 2.0
    %v617 = vmul.f32 %v585, 2.0
    %v618 = vmul.f32 %v586, 2.0
    %v619 = vmul.f32 %v587, 2.0
    %v620 = vmul.f32 %v588, 2.0
    %v621 = vmul.f32 %v589, 2.0
    %v622 = vmul.f32 %v590, 2.0
    %v623 = vmul.f32 %v591, 2.0
    %v624 = vmul.f32 %v592, 2.0
    %v625 = vmul.f32 %v593, 2.0
    %v626 = vmul.f32 %v594, 2.0
    %v627 = vmul.f32 %v595, 2.0
    %v628 = vmul.f32 %v596, 2.0
    %v629 = vmul.f32 %v597, 2.0
    %v630 = vmul.f32 %v598, 2.0
    %v631 = vmul.f32 %v599, 2.0
    %v632 = vmul.f32 %v600, 2.0
    %v633 = vmul.f32 %v601, 2.0
    %v634 = vmul.f32 %v602, 2.0
    %v635 = vmul.f32 %v603, 2.0
    %v636 = vmul.f32 %v604, 2.0
    %v637 = vmul.f32 %v605, 2.0
    %v638 = vmul.f32 %v606, 2.0
    %v639 = vmul.f32 %v607, 2.0
    %v640 = vsub.f32 %v384, %v608
    %v641 = vsub.f32 %v385, %v609
    %v642 = vsub.f32 %v386, %v610
    %v643 = vsub.f32 %v387, %v611
    %v644 = vsub.f32 %v388, %v612
    %v645 = vsub.f32 %v389, %v613
    %v646 = vsub.f32 %v390, %v614
    %v647 = vsub.f32 %v391, %v615
    %v648 = vsub.f32 %v392, %v616
    %v649 = vsub.f32 %v393, %v617
    %v650 = vsub.f32 %v394, %v618
    %v651 = vsub.f32 %v395, %v619
    %v652 = vsub.f32 %v396, %v620
    %v653 = vsub.f32 %v397, %v621
    %v654 = vsub.f32 %v398, %v622
    %v655 = vsub.f32 %v399, %v623
    %v656 = vsub.f32 %v400, %v624
    %v657 = vsub.f32 %v401, %v625
    %v658 = vsub.f32 %v402, %v626
    %v659 = vsub.f32 %v403, %v627
    %v660 = vsub.f32 %v404, %v628
    %v661 = vsub.f32 %v405, %v629
    %v662 = vsub.f32 %v406, %v630
    %v663 = vsub.f32 %v407, %v631
    %v664 = vsub.f32 %v408, %v632
    %v665 = vsub.f32 %v409, %v633
    %v666 = vsub.f32 %v410, %v634
    %v667 = vsub.f32 %v411, %v635
    %v668 = vsub.f32 %v412, %v636
    %v669 = vsub.f32 %v413, %v637
    %v670 = vsub.f32 %v414, %v638
    %v671 = vsub.f32 %v415, %v639
    %v672 = vmul.f32 %v640, 2.0
    %v673 = vmul.f32 %v641, 2.0
    %v674 = vmul.f32 %v642, 2.0
    %v675 = vmul.f32 %v643, 2.0
    %v676 = vmul.f32 %v644, 2.0
    %v677 = vmul.f32 %v645, 2.0
    %v678 = vmul.f32 %v646, 2.0
    %v679 = vmul.f32 %v647, 2.0
    %v680 = vmul.f32 %v648, 2.0
    %v681 = vmul.f32 %v649, 2.0
    %v682 = vmul.f32 %v650, 2.0
    %v683 = vmul.f32 %v651, 2.0
    %v684 = vmul.f32 %v652, 2.0
    %v685 = vmul.f32 %v653, 2.0
    %v686 = vmul.f32 %v654, 2.0
    %v687 = vmul.f32 %v655, 2.0
    %v688 = vmul.f32 %v656, 2.0
    %v689 = vmul.f32 %v657, 2.0
    %v690 = vmul.f32 %v658, 2.0
    %v691 = vmul.f32 %v659, 2.0
    %v692 = vmul.f32 %v660, 2.0
    %v693 = vmul.f32 %v661, 2.0
    %v694 = vmul.f32 %v662, 2.0
    %v695 = vmul.f32 %v663, 2.0
    %v696 = vmul.f32 %v664, 2.0
    %v697 = vmul.f32 %v665, 2.0
    %v698 = vmul.f32 %v666, 2.0
    %v699 = vmul.f32 %v667, 2.0
    %v700 = vmul.f32 %v668, 2.0
    %v701 = vmul.f32 %v669, 2.0
    %v702 = vmul.f32 %v670, 2.0
    %v703 = vmul.f32 %v671, 2.0
    %v704 = vsub.f32 1.0, %v672
    %v705 = vsub.f32 1.0, %v673
    %v706 = vsub.f32 1.0, %v674
    %v707 = vsub.f32 1.0, %v675
    %v708 = vsub.f32 1.0, %v676
    %v709 = vsub.f32 1.0, %v677
    %v710 = vsub.f32 1.0, %v678
    %v711 = vsub.f32 1.0, %v679
    %v712 = vsub.f32 1.0, %v680
    %v713 = vsub.f32 1.0, %v681
    %v714 = vsub.f32 1.0, %v682
    %v715 = vsub.f32 1.0, %v683
    %v716 = vsub.f32 1.0, %v684
    %v717 = vsub.f32 1.0, %v685
    %v718 = vsub.f32 1.0, %v686
    %v719 = vsub.f32 1.0, %v687
    %v720 = vsub.f32 1.0, %v688
    %v721 = vsub.f32 1.0, %v689
    %v722 = vsub.f32 1.0, %v690
    %v723 = vsub.f32 1.0, %v691
    %v724 = vsub.f32 1.0, %v692
    %v725 = vsub.f32 1.0, %v693
    %v726 = vsub.f32 1.0, %v694
    %v727 = vsub.f32 1.0, %v695
    %v728 = vsub.f32 1.0, %v696
    %v729 = vsub.f32 1.0, %v697
    %v730 = vsub.f32 1.0, %v698
    %v731 = vsub.f32 1.0, %v699
    %v732 = vsub.f32 1.0, %v700
    %v733 = vsub.f32 1.0, %v701
    %v734 = vsub.f32 1.0, %v702
    %v735 = vsub.f32 1.0, %v703
    %v736 = vmul.f32 %v512, %v512
    %v737 = vmul.f32 %v513, %v513
    %v738 = vmul.f32 %v514, %v514
    %v739 = vmul.f32 %v515, %v515
    %v740 = vmul.f32 %v516, %v516
    %v741 = vmul.f32 %v517, %v517
    %v742 = vmul.f32 %v518, %v518
    %v743 = vmul.f32 %v519, %v519
    %v744 = vmul.f32 %v520, %v520
    %v745 = vmul.f32 %v521, %v521
    %v746 = vmul.f32 %v522, %v522
    %v747 = vmul.f32 %v523, %v523
    %v748 = vmul.f32 %v524, %v524
    %v749 = vmul.f32 %v525, %v525
    %v750 = vmul.f32 %v526, %v526
    %v751 = vmul.f32 %v527, %v527
    %v752 = vmul.f32 %v528, %v528
    %v753 = vmul.f32 %v529, %v529
    %v754 = vmul.f32 %v530, %v530
    %v755 = vmul.f32 %v531, %v531
    %v756 = vmul.f32 %v532, %v532
    %v757 = vmul.f32 %v533, %v533
    %v758 = vmul.f32 %v534, %v534
    %v759 = vmul.f32 %v535, %v535
    %v760 = vmul.f32 %v536, %v536
    %v761 = vmul.f32 %v537, %v537
    %v762 = vmul.f32 %v538, %v538
    %v763 = vmul.f32 %v539, %v539
    %v764 = vmul.f32 %v540, %v540
    %v765 = vmul.f32 %v541, %v541
    %v766 = vmul.f32 %v542, %v542
    %v767 = vmul.f32 %v543, %v543
    %v768 = vmul.f32 %v736, -2.5052108e-08
    %v769 = vmul.f32 %v737, -2.5052108e-08
    %v770 = vmul.f32 %v738, -2.5052108e-08
    %v771 = vmul.f32 %v739, -2.5052108e-08
    %v772 = vmul.f32 %v740, -2.5052108e-08
    %v773 = vmul.f32 %v741, -2.5052108e-08
    %v774 = vmul.f32 %v742, -2.5052108e-08
    %v775 = vmul.f32 %v743, -2.5052108e-08
    %v776 = vmul.f32 %v744, -2.5052108e-08
    %v777 = vmul.f32 %v745, -2.5052108e-08
    %v778 = vmul.f32 %v746, -2.5052108e-08
    %v779 = vmul.f32 %v747, -2.5052108e-08
    %v780 = vmul.f32 %v748, -2.5052108e-08
    %v781 = vmul.f32 %v749, -2.5052108e-08
    %v782 = vmul.f32 %v750, -2.5052108e-08
    %v783 = vmul.f32 %v751, -2.5052108e-08
    %v784 = vmul.f32 %v752, -2.5052108e-08
    %v785 = vmul.f32 %v753, -2.5052108e-08
    %v786 = vmul.f32 %v754, -2.5052108e-08
    %v787 = vmul.f32 %v755, -2.5052108e-08
    %v788 = vmul.f32 %v756, -2.5052108e-08
    %v789 = vmul.f32 %v757, -2.5052108e-08
    %v790 = vmul.f32 %v758, -2.5052108e-08
    %v791 = vmul.f32 %v759, -2.5052108e-08
    %v792 = vmul.f32 %v760, -2.5052108e-08
    %v793 = vmul.f32 %v761, -2.5052108e-08
    %v794 = vmul.f32 %v762, -2.5052108e-08
    %v795 = vmul.f32 %v763, -2.5052108e-08
    %v796 = vmul.f32 %v764, -2.5052108e-08
    %v797 = vmul.f32 %v765, -2.5052108e-08
    %v798 = vmul.f32 %v766, -2.5052108e-08
    %v799 = vmul.f32 %v767, -2.5052108e-08
    %v800 = vadd.f32 %v768, 2.7557319e-06
    %v801 = vadd.f32 %v769, 2.7557319e-06
    %v802 = vadd.f32 %v770, 2.7557319e-06
    %v803 = vadd.f32 %v771, 2.7557319e-06
    %v804 = vadd.f32 %v772, 2.7557319e-06
    %v805 = vadd.f32 %v773, 2.7557319e-06
    %v806 = vadd.f32 %v774, 2.7557319e-06
    %v807 = vadd.f32 %v775, 2.7557319e-06
    %v808 = vadd.f32 %v776, 2.7557319e-06
    %v809 = vadd.f32 %v777, 2.7557319e-06
    %v810 = vadd.f32 %v778, 2.7557319e-06
    %v811 = vadd.f32 %v779, 2.7557319e-06
    %v812 = vadd.f32 %v780, 2.7557319e-06
    %v813 = vadd.f32 %v781, 2.7557319e-06
    %v814 = vadd.f32 %v782, 2.7557319e-06
    %v815 = vadd.f32 %v783, 2.7557319e-06
    %v816 = vadd.f32 %v784, 2.7557319e-06
    %v817 = vadd.f32 %v785, 2.7557319e-06
    %v818 = vadd.f32 %v786, 2.7557319e-06
    %v819 = vadd.f32 %v787, 2.7557319e-06
    %v820 = vadd.f32 %v788, 2.7557319e-06
    %v821 = vadd.f32 %v789, 2.7557319e-06
    %v822 = vadd.f32 %v790, 2.7557319e-06
    %v823 = vadd.f32 %v791, 2.7557319e-06
    %v824 = vadd.f32 %v792, 2.7557319e-06
    %v825 = vadd.f32 %v793, 2.7557319e-06
    %v826 = vadd.f32 %v794, 2.7557319e-06
    %v827 = vadd.f32 %v795, 2.7557319e-06
    %v828 = vadd.f32 %v796, 2.7557319e-06
    %v829 = vadd.f32 %v797, 2.7557319e-06
    %v830 = vadd.f32 %v798, 2.7557319e-06
    %v831 = vadd.f32 %v799, 2.7557319e-06
    %v832 = vmul.f32 %v800, %v736
    %v833 = vmul.f32 %v801, %v737
    %v834 = vmul.f32 %v802, %v738
    %v835 = vmul.f32 %v803, %v739
    %v836 = vmul.f32 %v804, %v740
    %v837 = vmul.f32 %v805, %v741
    %v838 = vmul.f32 %v806, %v742
    %v839 = vmul.f32 %v807, %v743
    %v840 = vmul.f32 %v808, %v744
    %v841 = vmul.f32 %v809, %v745
    %v842 = vmul.f32 %v810, %v746
    %v843 = vmul.f32 %v811, %v747
    %v844 = vmul.f32 %v812, %v748
    %v845 = vmul.f32 %v813, %v749
    %v846 = vmul.f32 %v814, %v750
    %v847 = vmul.f32 %v815, %v751
    %v848 = vmul.f32 %v816, %v752
    %v849 = vmul.f32 %v817, %v753
    %v850 = vmul.f32 %v818, %v754
    %v851 = vmul.f32 %v819, %v755
    %v852 = vmul.f32 %v820, %v756
    %v853 = vmul.f32 %v821, %v757
    %v854 = vmul.f32 %v822, %v758
    %v855 = vmul.f32 %v823, %v759
    %v856 = vmul.f32 %v824, %v760
    %v857 = vmul.f32 %v825, %v761
    %v858 = vmul.f32 %v826, %v762
    %v859 = vmul.f32 %v827, %v763
    %v860 = vmul.f32 %v828, %v764
    %v861 = vmul.f32 %v829, %v765
    %v862 = vmul.f32 %v830, %v766
    %v863 = vmul.f32 %v831, %v767
    %v864 = vsub.f32 %v832, 0.0001984127
    %v865 = vsub.f32 %v833, 0.0001984127
    %v866 = vsub.f32 %v834, 0.0001984127
    %v867 = vsub.f32 %v835, 0.0001984127
    %v868 = vsub.f32 %v836, 0.0001984127
    %v869 = vsub.f32 %v837, 0.0001984127
    %v870 = vsub.f32 %v838, 0.0001984127
    %v871 = vsub.f32 %v839, 0.0001984127
    %v872 = vsub.f32 %v840, 0.0001984127
    %v873 = vsub.f32 %v841, 0.0001984127
    %v874 = vsub.f32 %v842, 0.0001984127
    %v875 = vsub.f32 %v843, 0.0001984127
    %v876 = vsub.f32 %v844, 0.0001984127
    %v877 = vsub.f32 %v845, 0.0001984127
    %v878 = vsub.f32 %v846, 0.0001984127
    %v879 = vsub.f32 %v847, 0.0001984127
    %v880 = vsub.f32 %v848, 0.0001984127
    %v881 = vsub.f32 %v849, 0.0001984127
    %v882 = vsub.f32 %v850, 0.0001984127
    %v883 = vsub.f32 %v851, 0.0001984127
    %v884 = vsub.f32 %v852, 0.0001984127
    %v885 = vsub.f32 %v853, 0.0001984127
    %v886 = vsub.f32 %v854, 0.0001984127
    %v887 = vsub.f32 %v855, 0.0001984127
    %v888 = vsub.f32 %v856, 0.0001984127
    %v889 = vsub.f32 %v857, 0.0001984127
    %v890 = vsub.f32 %v858, 0.0001984127
    %v891 = vsub.f32 %v859, 0.0001984127
    %v892 = vsub.f32 %v860, 0.0001984127
    %v893 = vsub.f32 %v861, 0.0001984127
    %v894 = vsub.f32 %v862, 0.0001984127
    %v895 = vsub.f32 %v863, 0.0001984127
    %v896 = vmul.f32 %v864, %v736
    %v897 = vmul.f32 %v865, %v737
    %v898 = vmul.f32 %v866, %v738
    %v899 = vmul.f32 %v867, %v739
    %v900 = vmul.f32 %v868, %v740
    %v901 = vmul.f32 %v869, %v741
    %v902 = vmul.f32 %v870, %v742
    %v903 = vmul.f32 %v871, %v743
    %v904 = vmul.f32 %v872, %v744
    %v905 = vmul.f32 %v873, %v745
    %v906 = vmul.f32 %v874, %v746
    %v907 = vmul.f32 %v875, %v747
    %v908 = vmul.f32 %v876, %v748
    %v909 = vmul.f32 %v877, %v749
    %v910 = vmul.f32 %v878, %v750
    %v911 = vmul.f32 %v879, %v751
    %v912 = vmul.f32 %v880, %v752
    %v913 = vmul.f32 %v881, %v753
    %v914 = vmul.f32 %v882, %v754
    %v915 = vmul.f32 %v883, %v755
    %v916 = vmul.f32 %v884, %v756
    %v917 = vmul.f32 %v885, %v757
    %v918 = vmul.f32 %v886, %v758
    %v919 = vmul.f32 %v887, %v759
    %v920 = vmul.f32 %v888, %v760
    %v921 = vmul.f32 %v889, %v761
    %v922 = vmul.f32 %v890, %v762
    %v923 = vmul.f32 %v891, %v763
    %v924 = vmul.f32 %v892, %v764
    %v925 = vmul.f32 %v893, %v765
    %v926 = vmul.f32 %v894, %v766
    %v927 = vmul.f32 %v895, %v767
    %v928 = vadd.f32 %v896, 0.008333333
    %v929 = vadd.f32 %v897, 0.008333333
    %v930 = vadd.f32 %v898, 0.008333333
    %v931 = vadd.f32 %v899, 0.008333333
    %v932 = vadd.f32 %v900, 0.008333333
    %v933 = vadd.f32 %v901, 0.008333333
    %v934 = vadd.f32 %v902, 0.008333333
    %v935 = vadd.f32 %v903, 0.008333333
    %v936 = vadd.f32 %v904, 0.008333333
    %v937 = vadd.f32 %v905, 0.008333333
    %v938 = vadd.f32 %v906, 0.008333333
    %v939 = vadd.f32 %v907, 0.008333333
    %v940 = vadd.f32 %v908, 0.008333333
    %v941 = vadd.f32 %v909, 0.008333333
    %v942 = vadd.f32 %v910, 0.008333333
    %v943 = vadd.f32 %v911, 0.008333333
    %v944 = vadd.f32 %v912, 0.008333333
    %v945 = vadd.f32 %v913, 0.008333333
    %v946 = vadd.f32 %v914, 0.008333333
    %v947 = vadd.f32 %v915, 0.008333333
    %v948 = vadd.f32 %v916, 0.008333333
    %v949 = vadd.f32 %v917, 0.008333333
    %v950 = vadd.f32 %v918, 0.008333333
    %v951 = vadd.f32 %v919, 0.008333333
    %v952 = vadd.f32 %v920, 0.008333333
    %v953 = vadd.f32 %v921, 0.008333333
    %v954 = vadd.f32 %v922, 0.008333333
    %v955 = vadd.f32 %v923, 0.008333333
    %v956 = vadd.f32 %v924, 0.008333333
    %v957 = vadd.f32 %v925, 0.008333333
    %v958 = vadd.f32 %v926, 0.008333333
    %v959 = vadd.f32 %v927, 0.008333333
    %v960 = vmul.f32 %v928, %v736
    %v961 = vmul.f32 %v929, %v737
    %v962 = vmul.f32 %v930, %v738
    %v963 = vmul.f32 %v931, %v739
    %v964 = vmul.f32 %v932, %v740
    %v965 = vmul.f32 %v933, %v741
    %v966 = vmul.f32 %v934, %v742
    %v967 = vmul.f32 %v935, %v743
    %v968 = vmul.f32 %v936, %v744
    %v969 = vmul.f32 %v937, %v745
    %v970 = vmul.f32 %v938, %v746
    %v971 = vmul.f32 %v939, %v747
    %v972 = vmul.f32 %v940, %v748
    %v973 = vmul.f32 %v941, %v749
    %v974 = vmul.f32 %v942, %v750
    %v975 = vmul.f32 %v943, %v751
    %v976 = vmul.f32 %v944, %v752
    %v977 = vmul.f32 %v945, %v753
    %v978 = vmul.f32 %v946, %v754
    %v979 = vmul.f32 %v947, %v755
    %v980 = vmul.f32 %v948, %v756
    %v981 = vmul.f32 %v949, %v757
    %v982 = vmul.f32 %v950, %v758
    %v983 = vmul.f32 %v951, %v759
    %v984 = vmul.f32 %v952, %v760
    %v985 = vmul.f32 %v953, %v761
    %v986 = vmul.f32 %v954, %v762
    %v987 = vmul.f32 %v955, %v763
    %v988 = vmul.f32 %v956, %v764
    %v989 = vmul.f32 %v957, %v765
    %v990 = vmul.f32 %v958, %v766
    %v991 = vmul.f32 %v959, %v767
    %v992 = vsub.f32 %v960, 0.16666667
    %v993 = vsub.f32 %v961, 0.16666667
    %v994 = vsub.f32 %v962, 0.16666667
    %v995 = vsub.f32 %v963, 0.16666667
    %v996 = vsub.f32 %v964, 0.16666667
    %v997 = vsub.f32 %v965, 0.16666667
    %v998 = vsub.f32 %v966, 0.16666667
    %v999 = vsub.f32 %v967, 0.16666667
    %v1000 = vsub.f32 %v968, 0.16666667
    %v1001 = vsub.f32 %v969, 0.16666667
    %v1002 = vsub.f32 %v970, 0.16666667
    %v1003 = vsub.f32 %v971, 0.16666667
    %v1004 = vsub.f32 %v972, 0.16666667
    %v1005 = vsub.f32 %v973, 0.16666667
    %v1006 = vsub.f32 %v974, 0.16666667
    %v1007 = vsub.f32 %v975, 0.16666667
    %v1008 = vsub.f32 %v976, 0.16666667
    %v1009 = vsub.f32 %v977, 0.16666667
    %v1010 = vsub.f32 %v978, 0.16666667
    %v1011 = vsub.f32 %v979, 0.16666667
    %v1012 = vsub.f32 %v980, 0.16666667
    %v1013 = vsub.f32 %v981, 0.16666667
    %v1014 = vsub.f32 %v982, 0.16666667
    %v1015 = vsub.f32 %v983, 0.16666667
    %v1016 = vsub.f32 %v984, 0.16666667
    %v1017 = vsub.f32 %v985, 0.16666667
    %v1018 = vsub.f32 %v986, 0.16666667
    %v1019 = vsub.f32 %v987, 0.16666667
    %v1020 = vsub.f32 %v988, 0.16666667
    %v1021 = vsub.f32 %v989, 0.16666667
    %v1022 = vsub.f32 %v990, 0.16666667
    %v1023 = vsub.f32 %v991, 0.16666667
    %v1024 = vmul.f32 %v992, %v736
    %v1025 = vmul.f32 %v993, %v737
    %v1026 = vmul.f32 %v994, %v738
    %v1027 = vmul.f32 %v995, %v739
    %v1028 = vmul.f32 %v996, %v740
    %v1029 = vmul.f32 %v997, %v741
    %v1030 = vmul.f32 %v998, %v742
    %v1031 = vmul.f32 %v999, %v743
    %v1032 = vmul.f32 %v1000, %v744
    %v1033 = vmul.f32 %v1001, %v745
    %v1034 = vmul.f32 %v1002, %v746
    %v1035 = vmul.f32 %v1003, %v747
    %v1036 = vmul.f32 %v1004, %v748
    %v1037 = vmul.f32 %v1005, %v749
    %v1038 = vmul.f32 %v1006, %v750
    %v1039 = vmul.f32 %v1007, %v751
    %v1040 = vmul.f32 %v1008, %v752
    %v1041 = vmul.f32 %v1009, %v753
    %v1042 = vmul.f32 %v1010, %v754
    %v1043 = vmul.f32 %v1011, %v755
    %v1044 = vmul.f32 %v1012, %v756
    %v1045 = vmul.f32 %v1013, %v757
    %v1046 = vmul.f32 %v1014, %v758
    %v1047 = vmul.f32 %v1015, %v759
    %v1048 = vmul.f32 %v1016, %v760
    %v1049 = vmul.f32 %v1017, %v761
    %v1050 = vmul.f32 %v1018, %v762
    %v1051 = vmul.f32 %v1019, %v763
    %v1052 = vmul.f32 %v1020, %v764
    %v1053 = vmul.f32 %v1021, %v765
    %v1054 = vmul.f32 %v1022, %v766
    %v1055 = vmul.f32 %v1023, %v767
    %v1056 = vadd.f32 %v1024, 1.0
    %v1057 = vadd.f32 %v1025, 1.0
    %v1058 = vadd.f32 %v1026, 1.0
    %v1059 = vadd.f32 %v1027, 1.0
    %v1060 = vadd.f32 %v1028, 1.0
    %v1061 = vadd.f32 %v1029, 1.0
    %v1062 = vadd.f32 %v1030, 1.0
    %v1063 = vadd.f32 %v1031, 1.0
    %v1064 = vadd.f32 %v1032, 1.0
    %v1065 = vadd.f32 %v1033, 1.0
    %v1066 = vadd.f32 %v1034, 1.0
    %v1067 = vadd.f32 %v1035, 1.0
    %v1068 = vadd.f32 %v1036, 1.0
    %v1069 = vadd.f32 %v1037, 1.0
    %v1070 = vadd.f32 %v1038, 1.0
    %v1071 = vadd.f32 %v1039, 1.0
    %v1072 = vadd.f32 %v1040, 1.0
    %v1073 = vadd.f32 %v1041, 1.0
    %v1074 = vadd.f32 %v1042, 1.0
    %v1075 = vadd.f32 %v1043, 1.0
    %v1076 = vadd.f32 %v1044, 1.0
    %v1077 = vadd.f32 %v1045, 1.0
    %v1078 = vadd.f32 %v1046, 1.0
    %v1079 = vadd.f32 %v1047, 1.0
    %v1080 = vadd.f32 %v1048, 1.0
    %v1081 = vadd.f32 %v1049, 1.0
    %v1082 = vadd.f32 %v1050, 1.0
    %v1083 = vadd.f32 %v1051, 1.0
    %v1084 = vadd.f32 %v1052, 1.0
    %v1085 = vadd.f32 %v1053, 1.0
    %v1086 = vadd.f32 %v1054, 1.0
    %v1087 = vadd.f32 %v1055, 1.0
    %v1088 = vmul.f32 %v704, %v512
    %v1089 = vmul.f32 %v705, %v513
    %v1090 = vmul.f32 %v706, %v514
    %v1091 = vmul.f32 %v707, %v515
    %v1092 = vmul.f32 %v708, %v516
    %v1093 = vmul.f32 %v709, %v517
    %v1094 = vmul.f32 %v710, %v518
    %v1095 = vmul.f32 %v711, %v519
    %v1096 = vmul.f32 %v712, %v520
    %v1097 = vmul.f32 %v713, %v521
    %v1098 = vmul.f32 %v714, %v522
    %v1099 = vmul.f32 %v715, %v523
    %v1100 = vmul.f32 %v716, %v524
    %v1101 = vmul.f32 %v717, %v525
    %v1102 = vmul.f32 %v718, %v526
    %v1103 = vmul.f32 %v719, %v527
    %v1104 = vmul.f32 %v720, %v528
    %v1105 = vmul.f32 %v721, %v529
    %v1106 = vmul.f32 %v722, %v530
    %v1107 = vmul.f32 %v723, %v531
    %v1108 = vmul.f32 %v724, %v532
    %v1109 = vmul.f32 %v725, %v533
    %v1110 = vmul.f32 %v726, %v534
    %v1111 = vmul.f32 %v727, %v535
    %v1112 = vmul.f32 %v728, %v536
    %v1113 = vmul.f32 %v729, %v537
    %v1114 = vmul.f32 %v730, %v538
    %v1115 = vmul.f32 %v731, %v539
    %v1116 = vmul.f32 %v732, %v540
    %v1117 = vmul.f32 %v733, %v541
    %v1118 = vmul.f32 %v734, %v542
    %v1119 = vmul.f32 %v735, %v543
    %v1120 = vmul.f32 %v1088, %v1056
    %v1121 = vmul.f32 %v1089, %v1057
    %v1122 = vmul.f32 %v1090, %v1058
    %v1123 = vmul.f32 %v1091, %v1059
    %v1124 = vmul.f32 %v1092, %v1060
    %v1125 = vmul.f32 %v1093, %v1061
    %v1126 = vmul.f32 %v1094, %v1062
    %v1127 = vmul.f32 %v1095, %v1063
    %v1128 = vmul.f32 %v1096, %v1064
    %v1129 = vmul.f32 %v1097, %v1065
    %v1130 = vmul.f32 %v1098, %v1066
    %v1131 = vmul.f32 %v1099, %v1067
    %v1132 = vmul.f32 %v1100, %v1068
    %v1133 = vmul.f32 %v1101, %v1069
    %v1134 = vmul.f32 %v1102, %v1070
    %v1135 = vmul.f32 %v1103, %v1071
    %v1136 = vmul.f32 %v1104, %v1072
    %v1137 = vmul.f32 %v1105, %v1073
    %v1138 = vmul.f32 %v1106, %v1074
    %v1139 = vmul.f32 %v1107, %v1075
    %v1140 = vmul.f32 %v1108, %v1076
    %v1141 = vmul.f32 %v1109, %v1077
    %v1142 = vmul.f32 %v1110, %v1078
    %v1143 = vmul.f32 %v1111, %v1079
    %v1144 = vmul.f32 %v1112, %v1080
    %v1145 = vmul.f32 %v1113, %v1081
    %v1146 = vmul.f32 %v1114, %v1082
    %v1147 = vmul.f32 %v1115, %v1083
    %v1148 = vmul.f32 %v1116, %v1084
    %v1149 = vmul.f32 %v1117, %v1085
    %v1150 = vmul.f32 %v1118, %v1086
    %v1151 = vmul.f32 %v1119, %v1087
    %1152 = vst [vmem:[#allocation2] sm:$0xff] %v1120
    %1153 = vst [vmem:[#allocation2 + $0x8] sm:$0xff] %v1121
    %1154 = vst [vmem:[#allocation2 + $0x10] sm:$0xff] %v1122
    %1155 = vst [vmem:[#allocation2 + $0x18] sm:$0xff] %v1123
    %1156 = vst [vmem:[#allocation2 + $0x20] sm:$0xff] %v1124
    %1157 = vst [vmem:[#allocation2 + $0x28] sm:$0xff] %v1125
    %1158 = vst [vmem:[#allocation2 + $0x30] sm:$0xff] %v1126
    %1159 = vst [vmem:[#allocation2 + $0x38] sm:$0xff] %v1127
    %1160 = vst [vmem:[#allocation2 + $0x40] sm:$0xff] %v1128
    %1161 = vst [vmem:[#allocation2 + $0x48] sm:$0xff] %v1129
    %1162 = vst [vmem:[#allocation2 + $0x50] sm:$0xff] %v1130
    %1163 = vst [vmem:[#allocation2 + $0x58] sm:$0xff] %v1131
    %1164 = vst [vmem:[#allocation2 + $0x60] sm:$0xff] %v1132
    %1165 = vst [vmem:[#allocation2 + $0x68] sm:$0xff] %v1133
    %1166 = vst [vmem:[#allocation2 + $0x70] sm:$0xff] %v1134
    %1167 = vst [vmem:[#allocation2 + $0x78] sm:$0xff] %v1135
    %1168 = vst [vmem:[#allocation2 + $0x80] sm:$0xff] %v1136
    %1169 = vst [vmem:[#allocation2 + $0x88] sm:$0xff] %v1137
    %1170 = vst [vmem:[#allocation2 + $0x90] sm:$0xff] %v1138
    %1171 = vst [vmem:[#allocation2 + $0x98] sm:$0xff] %v1139
    %1172 = vst [vmem:[#allocation2 + $0xa0] sm:$0xff] %v1140
    %1173 = vst [vmem:[#allocation2 + $0xa8] sm:$0xff] %v1141
    %1174 = vst [vmem:[#allocation2 + $0xb0] sm:$0xff] %v1142
    %1175 = vst [vmem:[#allocation2 + $0xb8] sm:$0xff] %v1143
    %1176 = vst [vmem:[#allocation2 + $0xc0] sm:$0xff] %v1144
    %1177 = vst [vmem:[#allocation2 + $0xc8] sm:$0xff] %v1145
    %1178 = vst [vmem:[#allocation2 + $0xd0] sm:$0xff] %v1146
    %1179 = vst [vmem:[#allocation2 + $0xd8] sm:$0xff] %v1147
    %1180 = vst [vmem:[#allocation2 + $0xe0] sm:$0xff] %v1148
    %1181 = vst [vmem:[#allocation2 + $0xe8] sm:$0xff] %v1149
    %1182 = vst [vmem:[#allocation2 + $0xf0] sm:$0xff] %v1150
    %1183 = vst [vmem:[#allocation2 + $0xf8] sm:$0xff] %v1151
    %v1184 = vlaneseq
    %vm1185 = vcmp.ge.s32.totalorder %v1184, 0
    %vm1186 = vcmp.lt.s32.totalorder %v1184, 512
    %vm1187 = vmand %vm1185, %vm1186
    %s1188 = scalar_lea.vmem [#allocation2], 256
    %1189 = vst.msk [vmem:[%s1188] ss:$8 sm:$0xf] %vm1187, 1.0
    %1190 = vst.msk [vmem:[%s1188] ss:$8 sm:$0x0] %vm1187, 1.0
    %v1191 = vld [vmem:[#allocation6] sm:$0xff]
    %v1192 = vld [vmem:[#allocation6 + $0x8] sm:$0xff]
    %v1193 = vld [vmem:[#allocation6 + $0x10] sm:$0xff]
    %v1194 = vld [vmem:[#allocation6 + $0x18] sm:$0xff]
    %v1195 = vld [vmem:[#allocation6 + $0x20] sm:$0xff]
    %v1196 = vld [vmem:[#allocation6 + $0x28] sm:$0xff]
    %v1197 = vld [vmem:[#allocation6 + $0x30] sm:$0xff]
    %v1198 = vld [vmem:[#allocation6 + $0x38] sm:$0xff]
    %v1199 = vld [vmem:[#allocation2] sm:$0xff]
    %v1200 = vld [vmem:[#allocation2 + $0x8] sm:$0xff]
    %v1201 = vld [vmem:[#allocation2 + $0x10] sm:$0xff]
    %v1202 = vld [vmem:[#allocation2 + $0x18] sm:$0xff]
    %v1203 = vld [vmem:[#allocation2 + $0x20] sm:$0xff]
    %v1204 = vld [vmem:[#allocation2 + $0x28] sm:$0xff]
    %v1205 = vld [vmem:[#allocation2 + $0x30] sm:$0xff]
    %v1206 = vld [vmem:[#allocation2 + $0x38] sm:$0xff]
    %v1207 = vld [vmem:[#allocation2 + $0x40] sm:$0xff]
    %v1208 = vld [vmem:[#allocation2 + $0x48] sm:$0xff]
    %v1209 = vld [vmem:[#allocation2 + $0x50] sm:$0xff]
    %v1210 = vld [vmem:[#allocation2 + $0x58] sm:$0xff]
    %v1211 = vld [vmem:[#allocation2 + $0x60] sm:$0xff]
    %v1212 = vld [vmem:[#allocation2 + $0x68] sm:$0xff]
    %v1213 = vld [vmem:[#allocation2 + $0x70] sm:$0xff]
    %v1214 = vld [vmem:[#allocation2 + $0x78] sm:$0xff]
    %v1215 = vld [vmem:[#allocation2 + $0x80] sm:$0xff]
    %v1216 = vld [vmem:[#allocation2 + $0x88] sm:$0xff]
    %v1217 = vld [vmem:[#allocation2 + $0x90] sm:$0xff]
    %v1218 = vld [vmem:[#allocation2 + $0x98] sm:$0xff]
    %v1219 = vld [vmem:[#allocation2 + $0xa0] sm:$0xff]
    %v1220 = vld [vmem:[#allocation2 + $0xa8] sm:$0xff]
    %v1221 = vld [vmem:[#allocation2 + $0xb0] sm:$0xff]
    %v1222 = vld [vmem:[#allocation2 + $0xb8] sm:$0xff]
    %v1223 = vld [vmem:[#allocation2 + $0xc0] sm:$0xff]
    %v1224 = vld [vmem:[#allocation2 + $0xc8] sm:$0xff]
    %v1225 = vld [vmem:[#allocation2 + $0xd0] sm:$0xff]
    %v1226 = vld [vmem:[#allocation2 + $0xd8] sm:$0xff]
    %v1227 = vld [vmem:[#allocation2 + $0xe0] sm:$0xff]
    %v1228 = vld [vmem:[#allocation2 + $0xe8] sm:$0xff]
    %v1229 = vld [vmem:[#allocation2 + $0xf0] sm:$0xff]
    %v1230 = vld [vmem:[#allocation2 + $0xf8] sm:$0xff]
    %v1231 = vld [vmem:[#allocation2 + $0x100] sm:$0x1]
    %v1232 = vld [vmem:[#allocation2 + $0x108] sm:$0x1]
    %v1233 = vld [vmem:[#allocation2 + $0x110] sm:$0x1]
    %v1234 = vld [vmem:[#allocation2 + $0x118] sm:$0x1]
    %vm1235 = vcmask 531456
    %v1237 = vsel %vm1235, %v1191, 0
    %v1240 = vsel %vm1235, %v1192, 0
    %v1243 = vsel %vm1235, %v1193, 0
    %v1246 = vsel %vm1235, %v1194, 0
    %v1249 = vsel %vm1235, %v1195, 0
    %v1252 = vsel %vm1235, %v1196, 0
    %v1255 = vsel %vm1235, %v1197, 0
    %v1258 = vsel %vm1235, %v1198, 0
    %vm1260 = vcmask 1040384
    %v1262 = vsel %vm1260, %v1231, 0
    %v1265 = vsel %vm1260, %v1232, 0
    %v1268 = vsel %vm1260, %v1233, 0
    %v1271 = vsel %vm1260, %v1234, 0
    %1273 = vmatprep.subr.mxu0 %v1200
    %1274 = vmatpush1.msra.mxu0 %v1199
    %1275 = vmatprep.subr.mxu0 %v1204
    %1276 = vmatpush1.msra.mxu0 %v1203
    %1277 = vmatprep.subr.mxu0 %v1208
    %1278 = vmatpush1.msra.mxu0 %v1207
    %1279 = vmatprep.subr.mxu0 %v1212
    %1280 = vmatpush1.msra.mxu0 %v1211
    %1281 = vmatprep.subr.mxu0 %v1216
    %1282 = vmatpush1.msra.mxu0 %v1215
    %1283 = vmatprep.subr.mxu0 %v1220
    %1284 = vmatpush1.msra.mxu0 %v1219
    %1285 = vmatprep.subr.mxu0 %v1224
    %1286 = vmatpush1.msra.mxu0 %v1223
    %1287 = vmatprep.subr.mxu0 %v1228
    %1288 = vmatpush1.msra.mxu0 %v1227
    %1289 = vmatprep.subr.mxu0 %v1265
    %1290 = vmatpush1.msra.mxu0 %v1262
    %1291 = vmatprep.subr.mxu0 0.0
    %1292 = vmatpush1.msra.mxu0 0.0
    %1293 = vmatprep.subr.mxu0 0.0
    %1294 = vmatpush1.msra.mxu0 0.0
    %1295 = vmatprep.subr.mxu0 0.0
    %1296 = vmatpush1.msra.mxu0 0.0
    %1297 = vmatprep.subr.mxu0 0.0
    %1298 = vmatpush1.msra.mxu0 0.0
    %1299 = vmatprep.subr.mxu0 0.0
    %1300 = vmatpush1.msra.mxu0 0.0
    %1301 = vmatprep.subr.mxu0 0.0
    %1302 = vmatpush1.msra.mxu0 0.0
    %1303 = vmatprep.subr.mxu0 0.0
    %1304 = vmatpush1.msra.mxu0 0.0
    %1305 = vmatprep.subr.mxu0 0.0
    %1306 = vmatpush1.msra.mxu0 0.0
    %1307 = vmatprep.subr.mxu0 0.0
    %1308 = vmatpush1.msra.mxu0 0.0
    %1309 = vmatprep.subr.mxu0 0.0
    %1310 = vmatpush1.msra.mxu0 0.0
    %1311 = vmatprep.subr.mxu0 0.0
    %1312 = vmatpush1.msra.mxu0 0.0
    %1313 = vmatprep.subr.mxu0 0.0
    %1314 = vmatpush1.msra.mxu0 0.0
    %1315 = vmatprep.subr.mxu0 0.0
    %1316 = vmatpush1.msra.mxu0 0.0
    %1317 = vmatprep.subr.mxu0 0.0
    %1318 = vmatpush1.msra.mxu0 0.0
    %1319 = vmatprep.subr.mxu0 0.0
    %1320 = vmatpush1.msra.mxu0 0.0
    %1321 = vmatprep.subr.mxu0 0.0
    %1322 = vmatpush1.msra.mxu0 0.0
    %1323 = vmatprep.subr.mxu0 0.0
    %1324 = vmatpush1.msra.mxu0 0.0
    %1325 = vmatprep.subr.mxu0 0.0
    %1326 = vmatpush1.msra.mxu0 0.0
    %1327 = vmatprep.subr.mxu0 0.0
    %1328 = vmatpush1.msra.mxu0 0.0
    %1329 = vmatprep.subr.mxu0 0.0
    %1330 = vmatpush1.msra.mxu0 0.0
    %1331 = vmatprep.subr.mxu0 0.0
    %1332 = vmatpush1.msra.mxu0 0.0
    %1333 = vmatprep.subr.mxu0 0.0
    %1334 = vmatpush1.msra.mxu0 0.0
    %1335 = vmatprep.subr.mxu0 0.0
    %1336 = vmatpush1.msra.mxu0 0.0
    %1337 = vmatprep.mubr.f32.mxu0 0.0
    %1338 = vmatmul.mubr.f32.gmra.mrb[0].mxu0 %v1237
    %v1339 = vpop.f32.mrb[0].mxu0
    %v1340 = vadd.f32 0.0, %v1339
    %v1341 = vpop.f32.mrb[0].mxu0
    %v1342 = vadd.f32 0.0, %v1341
    %1343 = vmatprep.mubr.f32.mxu0 0.0
    %1344 = vmatmul.mubr.f32.gmra.mrb[0].mxu0 %v1240
    %v1345 = vpop.f32.mrb[0].mxu0
    %v1346 = vadd.f32 0.0, %v1345
    %v1347 = vpop.f32.mrb[0].mxu0
    %v1348 = vadd.f32 0.0, %v1347
    %1349 = vmatprep.mubr.f32.mxu0 0.0
    %1350 = vmatmul.mubr.f32.gmra.mrb[0].mxu0 %v1243
    %v1351 = vpop.f32.mrb[0].mxu0
    %v1352 = vadd.f32 0.0, %v1351
    %v1353 = vpop.f32.mrb[0].mxu0
    %v1354 = vadd.f32 0.0, %v1353
    %1355 = vmatprep.mubr.f32.mxu0 0.0
    %1356 = vmatmul.mubr.f32.gmra.mrb[0].mxu0 %v1246
    %v1357 = vpop.f32.mrb[0].mxu0
    %v1358 = vadd.f32 0.0, %v1357
    %v1359 = vpop.f32.mrb[0].mxu0
    %v1360 = vadd.f32 0.0, %v1359
    %1361 = vmatprep.mubr.f32.mxu0 0.0
    %1362 = vmatmul.mubr.f32.gmra.mrb[0].mxu0 %v1249
    %v1363 = vpop.f32.mrb[0].mxu0
    %v1364 = vadd.f32 0.0, %v1363
    %v1365 = vpop.f32.mrb[0].mxu0
    %v1366 = vadd.f32 0.0, %v1365
    %1367 = vmatprep.mubr.f32.mxu0 0.0
    %1368 = vmatmul.mubr.f32.gmra.mrb[0].mxu0 %v1252
    %v1369 = vpop.f32.mrb[0].mxu0
    %v1370 = vadd.f32 0.0, %v1369
    %v1371 = vpop.f32.mrb[0].mxu0
    %v1372 = vadd.f32 0.0, %v1371
    %1373 = vmatprep.mubr.f32.mxu0 0.0
    %1374 = vmatmul.mubr.f32.gmra.mrb[0].mxu0 %v1255
    %v1375 = vpop.f32.mrb[0].mxu0
    %v1376 = vadd.f32 0.0, %v1375
    %v1377 = vpop.f32.mrb[0].mxu0
    %v1378 = vadd.f32 0.0, %v1377
    %1379 = vmatprep.mubr.f32.mxu0 0.0
    %1380 = vmatmul.mubr.f32.gmra.mrb[0].mxu0 %v1258
    %v1381 = vpop.f32.mrb[0].mxu0
    %v1382 = vadd.f32 0.0, %v1381
    %v1383 = vpop.f32.mrb[0].mxu0
    %v1384 = vadd.f32 0.0, %v1383
    %1385 = vdwg.mxu0
    %1386 = vmatprep.subr.mxu0 %v1202
    %1387 = vmatpush1.msra.mxu0 %v1201
    %1388 = vmatprep.subr.mxu0 %v1206
    %1389 = vmatpush1.msra.mxu0 %v1205
    %1390 = vmatprep.subr.mxu0 %v1210
    %1391 = vmatpush1.msra.mxu0 %v1209
    %1392 = vmatprep.subr.mxu0 %v1214
    %1393 = vmatpush1.msra.mxu0 %v1213
    %1394 = vmatprep.subr.mxu0 %v1218
    %1395 = vmatpush1.msra.mxu0 %v1217
    %1396 = vmatprep.subr.mxu0 %v1222
    %1397 = vmatpush1.msra.mxu0 %v1221
    %1398 = vmatprep.subr.mxu0 %v1226
    %1399 = vmatpush1.msra.mxu0 %v1225
    %1400 = vmatprep.subr.mxu0 %v1230
    %1401 = vmatpush1.msra.mxu0 %v1229
    %1402 = vmatprep.subr.mxu0 %v1271
    %1403 = vmatpush1.msra.mxu0 %v1268
    %1404 = vmatprep.subr.mxu0 0.0
    %1405 = vmatpush1.msra.mxu0 0.0
    %1406 = vmatprep.subr.mxu0 0.0
    %1407 = vmatpush1.msra.mxu0 0.0
    %1408 = vmatprep.subr.mxu0 0.0
    %1409 = vmatpush1.msra.mxu0 0.0
    %1410 = vmatprep.subr.mxu0 0.0
    %1411 = vmatpush1.msra.mxu0 0.0
    %1412 = vmatprep.subr.mxu0 0.0
    %1413 = vmatpush1.msra.mxu0 0.0
    %1414 = vmatprep.subr.mxu0 0.0
    %1415 = vmatpush1.msra.mxu0 0.0
    %1416 = vmatprep.subr.mxu0 0.0
    %1417 = vmatpush1.msra.mxu0 0.0
    %1418 = vmatprep.subr.mxu0 0.0
    %1419 = vmatpush1.msra.mxu0 0.0
    %1420 = vmatprep.subr.mxu0 0.0
    %1421 = vmatpush1.msra.mxu0 0.0
    %1422 = vmatprep.subr.mxu0 0.0
    %1423 = vmatpush1.msra.mxu0 0.0
    %1424 = vmatprep.subr.mxu0 0.0
    %1425 = vmatpush1.msra.mxu0 0.0
    %1426 = vmatprep.subr.mxu0 0.0
    %1427 = vmatpush1.msra.mxu0 0.0
    %1428 = vmatprep.subr.mxu0 0.0
    %1429 = vmatpush1.msra.mxu0 0.0
    %1430 = vmatprep.subr.mxu0 0.0
    %1431 = vmatpush1.msra.mxu0 0.0
    %1432 = vmatprep.subr.mxu0 0.0
    %1433 = vmatpush1.msra.mxu0 0.0
    %1434 = vmatprep.subr.mxu0 0.0
    %1435 = vmatpush1.msra.mxu0 0.0
    %1436 = vmatprep.subr.mxu0 0.0
    %1437 = vmatpush1.msra.mxu0 0.0
    %1438 = vmatprep.subr.mxu0 0.0
    %1439 = vmatpush1.msra.mxu0 0.0
    %1440 = vmatprep.subr.mxu0 0.0
    %1441 = vmatpush1.msra.mxu0 0.0
    %1442 = vmatprep.subr.mxu0 0.0
    %1443 = vmatpush1.msra.mxu0 0.0
    %1444 = vmatprep.subr.mxu0 0.0
    %1445 = vmatpush1.msra.mxu0 0.0
    %1446 = vmatprep.subr.mxu0 0.0
    %1447 = vmatpush1.msra.mxu0 0.0
    %1448 = vmatprep.subr.mxu0 0.0
    %1449 = vmatpush1.msra.mxu0 0.0
    %1450 = vmatprep.mubr.f32.mxu0 0.0
    %1451 = vmatmul.mubr.f32.gmra.mrb[0].mxu0 %v1237
    %v1452 = vpop.f32.mrb[0].mxu0
    %v1453 = vadd.f32 0.0, %v1452
    %v1454 = vpop.f32.mrb[0].mxu0
    %v1455 = vadd.f32 0.0, %v1454
    %1456 = vmatprep.mubr.f32.mxu0 0.0
    %1457 = vmatmul.mubr.f32.gmra.mrb[0].mxu0 %v1240
    %v1458 = vpop.f32.mrb[0].mxu0
    %v1459 = vadd.f32 0.0, %v1458
    %v1460 = vpop.f32.mrb[0].mxu0
    %v1461 = vadd.f32 0.0, %v1460
    %1462 = vmatprep.mubr.f32.mxu0 0.0
    %1463 = vmatmul.mubr.f32.gmra.mrb[0].mxu0 %v1243
    %v1464 = vpop.f32.mrb[0].mxu0
    %v1465 = vadd.f32 0.0, %v1464
    %v1466 = vpop.f32.mrb[0].mxu0
    %v1467 = vadd.f32 0.0, %v1466
    %1468 = vmatprep.mubr.f32.mxu0 0.0
    %1469 = vmatmul.mubr.f32.gmra.mrb[0].mxu0 %v1246
    %v1470 = vpop.f32.mrb[0].mxu0
    %v1471 = vadd.f32 0.0, %v1470
    %v1472 = vpop.f32.mrb[0].mxu0
    %v1473 = vadd.f32 0.0, %v1472
    %1474 = vmatprep.mubr.f32.mxu0 0.0
    %1475 = vmatmul.mubr.f32.gmra.mrb[0].mxu0 %v1249
    %v1476 = vpop.f32.mrb[0].mxu0
    %v1477 = vadd.f32 0.0, %v1476
    %v1478 = vpop.f32.mrb[0].mxu0
    %v1479 = vadd.f32 0.0, %v1478
    %1480 = vmatprep.mubr.f32.mxu0 0.0
    %1481 = vmatmul.mubr.f32.gmra.mrb[0].mxu0 %v1252
    %v1482 = vpop.f32.mrb[0].mxu0
    %v1483 = vadd.f32 0.0, %v1482
    %v1484 = vpop.f32.mrb[0].mxu0
    %v1485 = vadd.f32 0.0, %v1484
    %1486 = vmatprep.mubr.f32.mxu0 0.0
    %1487 = vmatmul.mubr.f32.gmra.mrb[0].mxu0 %v1255
    %v1488 = vpop.f32.mrb[0].mxu0
    %v1489 = vadd.f32 0.0, %v1488
    %v1490 = vpop.f32.mrb[0].mxu0
    %v1491 = vadd.f32 0.0, %v1490
    %1492 = vmatprep.mubr.f32.mxu0 0.0
    %1493 = vmatmul.mubr.f32.gmra.mrb[0].mxu0 %v1258
    %v1494 = vpop.f32.mrb[0].mxu0
    %v1495 = vadd.f32 0.0, %v1494
    %v1496 = vpop.f32.mrb[0].mxu0
    %v1497 = vadd.f32 0.0, %v1496
    %1498 = vdwg.mxu0
    %v1499 = vmul.f32 %v1340, 0.31830987
    %v1500 = vmul.f32 %v1342, 0.31830987
    %v1501 = vmul.f32 %v1453, 0.31830987
    %v1502 = vmul.f32 %v1455, 0.31830987
    %v1503 = vmul.f32 %v1346, 0.31830987
    %v1504 = vmul.f32 %v1348, 0.31830987
    %v1505 = vmul.f32 %v1459, 0.31830987
    %v1506 = vmul.f32 %v1461, 0.31830987
    %v1507 = vmul.f32 %v1352, 0.31830987
    %v1508 = vmul.f32 %v1354, 0.31830987
    %v1509 = vmul.f32 %v1465, 0.31830987
    %v1510 = vmul.f32 %v1467, 0.31830987
    %v1511 = vmul.f32 %v1358, 0.31830987
    %v1512 = vmul.f32 %v1360, 0.31830987
    %v1513 = vmul.f32 %v1471, 0.31830987
    %v1514 = vmul.f32 %v1473, 0.31830987
    %v1515 = vmul.f32 %v1364, 0.31830987
    %v1516 = vmul.f32 %v1366, 0.31830987
    %v1517 = vmul.f32 %v1477, 0.31830987
    %v1518 = vmul.f32 %v1479, 0.31830987
    %v1519 = vmul.f32 %v1370, 0.31830987
    %v1520 = vmul.f32 %v1372, 0.31830987
    %v1521 = vmul.f32 %v1483, 0.31830987
    %v1522 = vmul.f32 %v1485, 0.31830987
    %v1523 = vmul.f32 %v1376, 0.31830987
    %v1524 = vmul.f32 %v1378, 0.31830987
    %v1525 = vmul.f32 %v1489, 0.31830987
    %v1526 = vmul.f32 %v1491, 0.31830987
    %v1527 = vmul.f32 %v1382, 0.31830987
    %v1528 = vmul.f32 %v1384, 0.31830987
    %v1529 = vmul.f32 %v1495, 0.31830987
    %v1530 = vmul.f32 %v1497, 0.31830987
    %v1531 = vadd.f32 %v1499, 0.5
    %v1532 = vadd.f32 %v1500, 0.5
    %v1533 = vadd.f32 %v1501, 0.5
    %v1534 = vadd.f32 %v1502, 0.5
    %v1535 = vadd.f32 %v1503, 0.5
    %v1536 = vadd.f32 %v1504, 0.5
    %v1537 = vadd.f32 %v1505, 0.5
    %v1538 = vadd.f32 %v1506, 0.5
    %v1539 = vadd.f32 %v1507, 0.5
    %v1540 = vadd.f32 %v1508, 0.5
    %v1541 = vadd.f32 %v1509, 0.5
    %v1542 = vadd.f32 %v1510, 0.5
    %v1543 = vadd.f32 %v1511, 0.5
    %v1544 = vadd.f32 %v1512, 0.5
    %v1545 = vadd.f32 %v1513, 0.5
    %v1546 = vadd.f32 %v1514, 0.5
    %v1547 = vadd.f32 %v1515, 0.5
    %v1548 = vadd.f32 %v1516, 0.5
    %v1549 = vadd.f32 %v1517, 0.5
    %v1550 = vadd.f32 %v1518, 0.5
    %v1551 = vadd.f32 %v1519, 0.5
    %v1552 = vadd.f32 %v1520, 0.5
    %v1553 = vadd.f32 %v1521, 0.5
    %v1554 = vadd.f32 %v1522, 0.5
    %v1555 = vadd.f32 %v1523, 0.5
    %v1556 = vadd.f32 %v1524, 0.5
    %v1557 = vadd.f32 %v1525, 0.5
    %v1558 = vadd.f32 %v1526, 0.5
    %v1559 = vadd.f32 %v1527, 0.5
    %v1560 = vadd.f32 %v1528, 0.5
    %v1561 = vadd.f32 %v1529, 0.5
    %v1562 = vadd.f32 %v1530, 0.5
    %v1563 = vfloor.f32 %v1531
    %v1564 = vfloor.f32 %v1532
    %v1565 = vfloor.f32 %v1533
    %v1566 = vfloor.f32 %v1534
    %v1567 = vfloor.f32 %v1535
    %v1568 = vfloor.f32 %v1536
    %v1569 = vfloor.f32 %v1537
    %v1570 = vfloor.f32 %v1538
    %v1571 = vfloor.f32 %v1539
    %v1572 = vfloor.f32 %v1540
    %v1573 = vfloor.f32 %v1541
    %v1574 = vfloor.f32 %v1542
    %v1575 = vfloor.f32 %v1543
    %v1576 = vfloor.f32 %v1544
    %v1577 = vfloor.f32 %v1545
    %v1578 = vfloor.f32 %v1546
    %v1579 = vfloor.f32 %v1547
    %v1580 = vfloor.f32 %v1548
    %v1581 = vfloor.f32 %v1549
    %v1582 = vfloor.f32 %v1550
    %v1583 = vfloor.f32 %v1551
    %v1584 = vfloor.f32 %v1552
    %v1585 = vfloor.f32 %v1553
    %v1586 = vfloor.f32 %v1554
    %v1587 = vfloor.f32 %v1555
    %v1588 = vfloor.f32 %v1556
    %v1589 = vfloor.f32 %v1557
    %v1590 = vfloor.f32 %v1558
    %v1591 = vfloor.f32 %v1559
    %v1592 = vfloor.f32 %v1560
    %v1593 = vfloor.f32 %v1561
    %v1594 = vfloor.f32 %v1562
    %v1595 = vmul.f32 %v1563, 3.140625
    %v1596 = vmul.f32 %v1564, 3.140625
    %v1597 = vmul.f32 %v1565, 3.140625
    %v1598 = vmul.f32 %v1566, 3.140625
    %v1599 = vmul.f32 %v1567, 3.140625
    %v1600 = vmul.f32 %v1568, 3.140625
    %v1601 = vmul.f32 %v1569, 3.140625
    %v1602 = vmul.f32 %v1570, 3.140625
    %v1603 = vmul.f32 %v1571, 3.140625
    %v1604 = vmul.f32 %v1572, 3.140625
    %v1605 = vmul.f32 %v1573, 3.140625
    %v1606 = vmul.f32 %v1574, 3.140625
    %v1607 = vmul.f32 %v1575, 3.140625
    %v1608 = vmul.f32 %v1576, 3.140625
    %v1609 = vmul.f32 %v1577, 3.140625
    %v1610 = vmul.f32 %v1578, 3.140625
    %v1611 = vmul.f32 %v1579, 3.140625
    %v1612 = vmul.f32 %v1580, 3.140625
    %v1613 = vmul.f32 %v1581, 3.140625
    %v1614 = vmul.f32 %v1582, 3.140625
    %v1615 = vmul.f32 %v1583, 3.140625
    %v1616 = vmul.f32 %v1584, 3.140625
    %v1617 = vmul.f32 %v1585, 3.140625
    %v1618 = vmul.f32 %v1586, 3.140625
    %v1619 = vmul.f32 %v1587, 3.140625
    %v1620 = vmul.f32 %v1588, 3.140625
    %v1621 = vmul.f32 %v1589, 3.140625
    %v1622 = vmul.f32 %v1590, 3.140625
    %v1623 = vmul.f32 %v1591, 3.140625
    %v1624 = vmul.f32 %v1592, 3.140625
    %v1625 = vmul.f32 %v1593, 3.140625
    %v1626 = vmul.f32 %v1594, 3.140625
    %v1627 = vsub.f32 %v1340, %v1595
    %v1628 = vsub.f32 %v1342, %v1596
    %v1629 = vsub.f32 %v1453, %v1597
    %v1630 = vsub.f32 %v1455, %v1598
    %v1631 = vsub.f32 %v1346, %v1599
    %v1632 = vsub.f32 %v1348, %v1600
    %v1633 = vsub.f32 %v1459, %v1601
    %v1634 = vsub.f32 %v1461, %v1602
    %v1635 = vsub.f32 %v1352, %v1603
    %v1636 = vsub.f32 %v1354, %v1604
    %v1637 = vsub.f32 %v1465, %v1605
    %v1638 = vsub.f32 %v1467, %v1606
    %v1639 = vsub.f32 %v1358, %v1607
    %v1640 = vsub.f32 %v1360, %v1608
    %v1641 = vsub.f32 %v1471, %v1609
    %v1642 = vsub.f32 %v1473, %v1610
    %v1643 = vsub.f32 %v1364, %v1611
    %v1644 = vsub.f32 %v1366, %v1612
    %v1645 = vsub.f32 %v1477, %v1613
    %v1646 = vsub.f32 %v1479, %v1614
    %v1647 = vsub.f32 %v1370, %v1615
    %v1648 = vsub.f32 %v1372, %v1616
    %v1649 = vsub.f32 %v1483, %v1617
    %v1650 = vsub.f32 %v1485, %v1618
    %v1651 = vsub.f32 %v1376, %v1619
    %v1652 = vsub.f32 %v1378, %v1620
    %v1653 = vsub.f32 %v1489, %v1621
    %v1654 = vsub.f32 %v1491, %v1622
    %v1655 = vsub.f32 %v1382, %v1623
    %v1656 = vsub.f32 %v1384, %v1624
    %v1657 = vsub.f32 %v1495, %v1625
    %v1658 = vsub.f32 %v1497, %v1626
    %v1659 = vmul.f32 %v1563, 0.0009676536
    %v1660 = vmul.f32 %v1564, 0.0009676536
    %v1661 = vmul.f32 %v1565, 0.0009676536
    %v1662 = vmul.f32 %v1566, 0.0009676536
    %v1663 = vmul.f32 %v1567, 0.0009676536
    %v1664 = vmul.f32 %v1568, 0.0009676536
    %v1665 = vmul.f32 %v1569, 0.0009676536
    %v1666 = vmul.f32 %v1570, 0.0009676536
    %v1667 = vmul.f32 %v1571, 0.0009676536
    %v1668 = vmul.f32 %v1572, 0.0009676536
    %v1669 = vmul.f32 %v1573, 0.0009676536
    %v1670 = vmul.f32 %v1574, 0.0009676536
    %v1671 = vmul.f32 %v1575, 0.0009676536
    %v1672 = vmul.f32 %v1576, 0.0009676536
    %v1673 = vmul.f32 %v1577, 0.0009676536
    %v1674 = vmul.f32 %v1578, 0.0009676536
    %v1675 = vmul.f32 %v1579, 0.0009676536
    %v1676 = vmul.f32 %v1580, 0.0009676536
    %v1677 = vmul.f32 %v1581, 0.0009676536
    %v1678 = vmul.f32 %v1582, 0.0009676536
    %v1679 = vmul.f32 %v1583, 0.0009676536
    %v1680 = vmul.f32 %v1584, 0.0009676536
    %v1681 = vmul.f32 %v1585, 0.0009676536
    %v1682 = vmul.f32 %v1586, 0.0009676536
    %v1683 = vmul.f32 %v1587, 0.0009676536
    %v1684 = vmul.f32 %v1588, 0.0009676536
    %v1685 = vmul.f32 %v1589, 0.0009676536
    %v1686 = vmul.f32 %v1590, 0.0009676536
    %v1687 = vmul.f32 %v1591, 0.0009676536
    %v1688 = vmul.f32 %v1592, 0.0009676536
    %v1689 = vmul.f32 %v1593, 0.0009676536
    %v1690 = vmul.f32 %v1594, 0.0009676536
    %v1691 = vsub.f32 %v1627, %v1659
    %v1692 = vsub.f32 %v1628, %v1660
    %v1693 = vsub.f32 %v1629, %v1661
    %v1694 = vsub.f32 %v1630, %v1662
    %v1695 = vsub.f32 %v1631, %v1663
    %v1696 = vsub.f32 %v1632, %v1664
    %v1697 = vsub.f32 %v1633, %v1665
    %v1698 = vsub.f32 %v1634, %v1666
    %v1699 = vsub.f32 %v1635, %v1667
    %v1700 = vsub.f32 %v1636, %v1668
    %v1701 = vsub.f32 %v1637, %v1669
    %v1702 = vsub.f32 %v1638, %v1670
    %v1703 = vsub.f32 %v1639, %v1671
    %v1704 = vsub.f32 %v1640, %v1672
    %v1705 = vsub.f32 %v1641, %v1673
    %v1706 = vsub.f32 %v1642, %v1674
    %v1707 = vsub.f32 %v1643, %v1675
    %v1708 = vsub.f32 %v1644, %v1676
    %v1709 = vsub.f32 %v1645, %v1677
    %v1710 = vsub.f32 %v1646, %v1678
    %v1711 = vsub.f32 %v1647, %v1679
    %v1712 = vsub.f32 %v1648, %v1680
    %v1713 = vsub.f32 %v1649, %v1681
    %v1714 = vsub.f32 %v1650, %v1682
    %v1715 = vsub.f32 %v1651, %v1683
    %v1716 = vsub.f32 %v1652, %v1684
    %v1717 = vsub.f32 %v1653, %v1685
    %v1718 = vsub.f32 %v1654, %v1686
    %v1719 = vsub.f32 %v1655, %v1687
    %v1720 = vsub.f32 %v1656, %v1688
    %v1721 = vsub.f32 %v1657, %v1689
    %v1722 = vsub.f32 %v1658, %v1690
    %v1723 = vmul.f32 %v1563, 0.5
    %v1724 = vmul.f32 %v1564, 0.5
    %v1725 = vmul.f32 %v1565, 0.5
    %v1726 = vmul.f32 %v1566, 0.5
    %v1727 = vmul.f32 %v1567, 0.5
    %v1728 = vmul.f32 %v1568, 0.5
    %v1729 = vmul.f32 %v1569, 0.5
    %v1730 = vmul.f32 %v1570, 0.5
    %v1731 = vmul.f32 %v1571, 0.5
    %v1732 = vmul.f32 %v1572, 0.5
    %v1733 = vmul.f32 %v1573, 0.5
    %v1734 = vmul.f32 %v1574, 0.5
    %v1735 = vmul.f32 %v1575, 0.5
    %v1736 = vmul.f32 %v1576, 0.5
    %v1737 = vmul.f32 %v1577, 0.5
    %v1738 = vmul.f32 %v1578, 0.5
    %v1739 = vmul.f32 %v1579, 0.5
    %v1740 = vmul.f32 %v1580, 0.5
    %v1741 = vmul.f32 %v1581, 0.5
    %v1742 = vmul.f32 %v1582, 0.5
    %v1743 = vmul.f32 %v1583, 0.5
    %v1744 = vmul.f32 %v1584, 0.5
    %v1745 = vmul.f32 %v1585, 0.5
    %v1746 = vmul.f32 %v1586, 0.5
    %v1747 = vmul.f32 %v1587, 0.5
    %v1748 = vmul.f32 %v1588, 0.5
    %v1749 = vmul.f32 %v1589, 0.5
    %v1750 = vmul.f32 %v1590, 0.5
    %v1751 = vmul.f32 %v1591, 0.5
    %v1752 = vmul.f32 %v1592, 0.5
    %v1753 = vmul.f32 %v1593, 0.5
    %v1754 = vmul.f32 %v1594, 0.5
    %v1755 = vfloor.f32 %v1723
    %v1756 = vfloor.f32 %v1724
    %v1757 = vfloor.f32 %v1725
    %v1758 = vfloor.f32 %v1726
    %v1759 = vfloor.f32 %v1727
    %v1760 = vfloor.f32 %v1728
    %v1761 = vfloor.f32 %v1729
    %v1762 = vfloor.f32 %v1730
    %v1763 = vfloor.f32 %v1731
    %v1764 = vfloor.f32 %v1732
    %v1765 = vfloor.f32 %v1733
    %v1766 = vfloor.f32 %v1734
    %v1767 = vfloor.f32 %v1735
    %v1768 = vfloor.f32 %v1736
    %v1769 = vfloor.f32 %v1737
    %v1770 = vfloor.f32 %v1738
    %v1771 = vfloor.f32 %v1739
    %v1772 = vfloor.f32 %v1740
    %v1773 = vfloor.f32 %v1741
    %v1774 = vfloor.f32 %v1742
    %v1775 = vfloor.f32 %v1743
    %v1776 = vfloor.f32 %v1744
    %v1777 = vfloor.f32 %v1745
    %v1778 = vfloor.f32 %v1746
    %v1779 = vfloor.f32 %v1747
    %v1780 = vfloor.f32 %v1748
    %v1781 = vfloor.f32 %v1749
    %v1782 = vfloor.f32 %v1750
    %v1783 = vfloor.f32 %v1751
    %v1784 = vfloor.f32 %v1752
    %v1785 = vfloor.f32 %v1753
    %v1786 = vfloor.f32 %v1754
    %v1787 = vmul.f32 %v1755, 2.0
    %v1788 = vmul.f32 %v1756, 2.0
    %v1789 = vmul.f32 %v1757, 2.0
    %v1790 = vmul.f32 %v1758, 2.0
    %v1791 = vmul.f32 %v1759, 2.0
    %v1792 = vmul.f32 %v1760, 2.0
    %v1793 = vmul.f32 %v1761, 2.0
    %v1794 = vmul.f32 %v1762, 2.0
    %v1795 = vmul.f32 %v1763, 2.0
    %v1796 = vmul.f32 %v1764, 2.0
    %v1797 = vmul.f32 %v1765, 2.0
    %v1798 = vmul.f32 %v1766, 2.0
    %v1799 = vmul.f32 %v1767, 2.0
    %v1800 = vmul.f32 %v1768, 2.0
    %v1801 = vmul.f32 %v1769, 2.0
    %v1802 = vmul.f32 %v1770, 2.0
    %v1803 = vmul.f32 %v1771, 2.0
    %v1804 = vmul.f32 %v1772, 2.0
    %v1805 = vmul.f32 %v1773, 2.0
    %v1806 = vmul.f32 %v1774, 2.0
    %v1807 = vmul.f32 %v1775, 2.0
    %v1808 = vmul.f32 %v1776, 2.0
    %v1809 = vmul.f32 %v1777, 2.0
    %v1810 = vmul.f32 %v1778, 2.0
    %v1811 = vmul.f32 %v1779, 2.0
    %v1812 = vmul.f32 %v1780, 2.0
    %v1813 = vmul.f32 %v1781, 2.0
    %v1814 = vmul.f32 %v1782, 2.0
    %v1815 = vmul.f32 %v1783, 2.0
    %v1816 = vmul.f32 %v1784, 2.0
    %v1817 = vmul.f32 %v1785, 2.0
    %v1818 = vmul.f32 %v1786, 2.0
    %v1819 = vsub.f32 %v1563, %v1787
    %v1820 = vsub.f32 %v1564, %v1788
    %v1821 = vsub.f32 %v1565, %v1789
    %v1822 = vsub.f32 %v1566, %v1790
    %v1823 = vsub.f32 %v1567, %v1791
    %v1824 = vsub.f32 %v1568, %v1792
    %v1825 = vsub.f32 %v1569, %v1793
    %v1826 = vsub.f32 %v1570, %v1794
    %v1827 = vsub.f32 %v1571, %v1795
    %v1828 = vsub.f32 %v1572, %v1796
    %v1829 = vsub.f32 %v1573, %v1797
    %v1830 = vsub.f32 %v1574, %v1798
    %v1831 = vsub.f32 %v1575, %v1799
    %v1832 = vsub.f32 %v1576, %v1800
    %v1833 = vsub.f32 %v1577, %v1801
    %v1834 = vsub.f32 %v1578, %v1802
    %v1835 = vsub.f32 %v1579, %v1803
    %v1836 = vsub.f32 %v1580, %v1804
    %v1837 = vsub.f32 %v1581, %v1805
    %v1838 = vsub.f32 %v1582, %v1806
    %v1839 = vsub.f32 %v1583, %v1807
    %v1840 = vsub.f32 %v1584, %v1808
    %v1841 = vsub.f32 %v1585, %v1809
    %v1842 = vsub.f32 %v1586, %v1810
    %v1843 = vsub.f32 %v1587, %v1811
    %v1844 = vsub.f32 %v1588, %v1812
    %v1845 = vsub.f32 %v1589, %v1813
    %v1846 = vsub.f32 %v1590, %v1814
    %v1847 = vsub.f32 %v1591, %v1815
    %v1848 = vsub.f32 %v1592, %v1816
    %v1849 = vsub.f32 %v1593, %v1817
    %v1850 = vsub.f32 %v1594, %v1818
    %v1851 = vmul.f32 %v1819, 2.0
    %v1852 = vmul.f32 %v1820, 2.0
    %v1853 = vmul.f32 %v1821, 2.0
    %v1854 = vmul.f32 %v1822, 2.0
    %v1855 = vmul.f32 %v1823, 2.0
    %v1856 = vmul.f32 %v1824, 2.0
    %v1857 = vmul.f32 %v1825, 2.0
    %v1858 = vmul.f32 %v1826, 2.0
    %v1859 = vmul.f32 %v1827, 2.0
    %v1860 = vmul.f32 %v1828, 2.0
    %v1861 = vmul.f32 %v1829, 2.0
    %v1862 = vmul.f32 %v1830, 2.0
    %v1863 = vmul.f32 %v1831, 2.0
    %v1864 = vmul.f32 %v1832, 2.0
    %v1865 = vmul.f32 %v1833, 2.0
    %v1866 = vmul.f32 %v1834, 2.0
    %v1867 = vmul.f32 %v1835, 2.0
    %v1868 = vmul.f32 %v1836, 2.0
    %v1869 = vmul.f32 %v1837, 2.0
    %v1870 = vmul.f32 %v1838, 2.0
    %v1871 = vmul.f32 %v1839, 2.0
    %v1872 = vmul.f32 %v1840, 2.0
    %v1873 = vmul.f32 %v1841, 2.0
    %v1874 = vmul.f32 %v1842, 2.0
    %v1875 = vmul.f32 %v1843, 2.0
    %v1876 = vmul.f32 %v1844, 2.0
    %v1877 = vmul.f32 %v1845, 2.0
    %v1878 = vmul.f32 %v1846, 2.0
    %v1879 = vmul.f32 %v1847, 2.0
    %v1880 = vmul.f32 %v1848, 2.0
    %v1881 = vmul.f32 %v1849, 2.0
    %v1882 = vmul.f32 %v1850, 2.0
    %v1883 = vsub.f32 1.0, %v1851
    %v1884 = vsub.f32 1.0, %v1852
    %v1885 = vsub.f32 1.0, %v1853
    %v1886 = vsub.f32 1.0, %v1854
    %v1887 = vsub.f32 1.0, %v1855
    %v1888 = vsub.f32 1.0, %v1856
    %v1889 = vsub.f32 1.0, %v1857
    %v1890 = vsub.f32 1.0, %v1858
    %v1891 = vsub.f32 1.0, %v1859
    %v1892 = vsub.f32 1.0, %v1860
    %v1893 = vsub.f32 1.0, %v1861
    %v1894 = vsub.f32 1.0, %v1862
    %v1895 = vsub.f32 1.0, %v1863
    %v1896 = vsub.f32 1.0, %v1864
    %v1897 = vsub.f32 1.0, %v1865
    %v1898 = vsub.f32 1.0, %v1866
    %v1899 = vsub.f32 1.0, %v1867
    %v1900 = vsub.f32 1.0, %v1868
    %v1901 = vsub.f32 1.0, %v1869
    %v1902 = vsub.f32 1.0, %v1870
    %v1903 = vsub.f32 1.0, %v1871
    %v1904 = vsub.f32 1.0, %v1872
    %v1905 = vsub.f32 1.0, %v1873
    %v1906 = vsub.f32 1.0, %v1874
    %v1907 = vsub.f32 1.0, %v1875
    %v1908 = vsub.f32 1.0, %v1876
    %v1909 = vsub.f32 1.0, %v1877
    %v1910 = vsub.f32 1.0, %v1878
    %v1911 = vsub.f32 1.0, %v1879
    %v1912 = vsub.f32 1.0, %v1880
    %v1913 = vsub.f32 1.0, %v1881
    %v1914 = vsub.f32 1.0, %v1882
    %v1915 = vmul.f32 %v1691, %v1691
    %v1916 = vmul.f32 %v1692, %v1692
    %v1917 = vmul.f32 %v1693, %v1693
    %v1918 = vmul.f32 %v1694, %v1694
    %v1919 = vmul.f32 %v1695, %v1695
    %v1920 = vmul.f32 %v1696, %v1696
    %v1921 = vmul.f32 %v1697, %v1697
    %v1922 = vmul.f32 %v1698, %v1698
    %v1923 = vmul.f32 %v1699, %v1699
    %v1924 = vmul.f32 %v1700, %v1700
    %v1925 = vmul.f32 %v1701, %v1701
    %v1926 = vmul.f32 %v1702, %v1702
    %v1927 = vmul.f32 %v1703, %v1703
    %v1928 = vmul.f32 %v1704, %v1704
    %v1929 = vmul.f32 %v1705, %v1705
    %v1930 = vmul.f32 %v1706, %v1706
    %v1931 = vmul.f32 %v1707, %v1707
    %v1932 = vmul.f32 %v1708, %v1708
    %v1933 = vmul.f32 %v1709, %v1709
    %v1934 = vmul.f32 %v1710, %v1710
    %v1935 = vmul.f32 %v1711, %v1711
    %v1936 = vmul.f32 %v1712, %v1712
    %v1937 = vmul.f32 %v1713, %v1713
    %v1938 = vmul.f32 %v1714, %v1714
    %v1939 = vmul.f32 %v1715, %v1715
    %v1940 = vmul.f32 %v1716, %v1716
    %v1941 = vmul.f32 %v1717, %v1717
    %v1942 = vmul.f32 %v1718, %v1718
    %v1943 = vmul.f32 %v1719, %v1719
    %v1944 = vmul.f32 %v1720, %v1720
    %v1945 = vmul.f32 %v1721, %v1721
    %v1946 = vmul.f32 %v1722, %v1722
    %v1947 = vmul.f32 %v1915, -2.5052108e-08
    %v1948 = vmul.f32 %v1916, -2.5052108e-08
    %v1949 = vmul.f32 %v1917, -2.5052108e-08
    %v1950 = vmul.f32 %v1918, -2.5052108e-08
    %v1951 = vmul.f32 %v1919, -2.5052108e-08
    %v1952 = vmul.f32 %v1920, -2.5052108e-08
    %v1953 = vmul.f32 %v1921, -2.5052108e-08
    %v1954 = vmul.f32 %v1922, -2.5052108e-08
    %v1955 = vmul.f32 %v1923, -2.5052108e-08
    %v1956 = vmul.f32 %v1924, -2.5052108e-08
    %v1957 = vmul.f32 %v1925, -2.5052108e-08
    %v1958 = vmul.f32 %v1926, -2.5052108e-08
    %v1959 = vmul.f32 %v1927, -2.5052108e-08
    %v1960 = vmul.f32 %v1928, -2.5052108e-08
    %v1961 = vmul.f32 %v1929, -2.5052108e-08
    %v1962 = vmul.f32 %v1930, -2.5052108e-08
    %v1963 = vmul.f32 %v1931, -2.5052108e-08
    %v1964 = vmul.f32 %v1932, -2.5052108e-08
    %v1965 = vmul.f32 %v1933, -2.5052108e-08
    %v1966 = vmul.f32 %v1934, -2.5052108e-08
    %v1967 = vmul.f32 %v1935, -2.5052108e-08
    %v1968 = vmul.f32 %v1936, -2.5052108e-08
    %v1969 = vmul.f32 %v1937, -2.5052108e-08
    %v1970 = vmul.f32 %v1938, -2.5052108e-08
    %v1971 = vmul.f32 %v1939, -2.5052108e-08
    %v1972 = vmul.f32 %v1940, -2.5052108e-08
    %v1973 = vmul.f32 %v1941, -2.5052108e-08
    %v1974 = vmul.f32 %v1942, -2.5052108e-08
    %v1975 = vmul.f32 %v1943, -2.5052108e-08
    %v1976 = vmul.f32 %v1944, -2.5052108e-08
    %v1977 = vmul.f32 %v1945, -2.5052108e-08
    %v1978 = vmul.f32 %v1946, -2.5052108e-08
    %v1979 = vadd.f32 %v1947, 2.7557319e-06
    %v1980 = vadd.f32 %v1948, 2.7557319e-06
    %v1981 = vadd.f32 %v1949, 2.7557319e-06
    %v1982 = vadd.f32 %v1950, 2.7557319e-06
    %v1983 = vadd.f32 %v1951, 2.7557319e-06
    %v1984 = vadd.f32 %v1952, 2.7557319e-06
    %v1985 = vadd.f32 %v1953, 2.7557319e-06
    %v1986 = vadd.f32 %v1954, 2.7557319e-06
    %v1987 = vadd.f32 %v1955, 2.7557319e-06
    %v1988 = vadd.f32 %v1956, 2.7557319e-06
    %v1989 = vadd.f32 %v1957, 2.7557319e-06
    %v1990 = vadd.f32 %v1958, 2.7557319e-06
    %v1991 = vadd.f32 %v1959, 2.7557319e-06
    %v1992 = vadd.f32 %v1960, 2.7557319e-06
    %v1993 = vadd.f32 %v1961, 2.7557319e-06
    %v1994 = vadd.f32 %v1962, 2.7557319e-06
    %v1995 = vadd.f32 %v1963, 2.7557319e-06
    %v1996 = vadd.f32 %v1964, 2.7557319e-06
    %v1997 = vadd.f32 %v1965, 2.7557319e-06
    %v1998 = vadd.f32 %v1966, 2.7557319e-06
    %v1999 = vadd.f32 %v1967, 2.7557319e-06
    %v2000 = vadd.f32 %v1968, 2.7557319e-06
    %v2001 = vadd.f32 %v1969, 2.7557319e-06
    %v2002 = vadd.f32 %v1970, 2.7557319e-06
    %v2003 = vadd.f32 %v1971, 2.7557319e-06
    %v2004 = vadd.f32 %v1972, 2.7557319e-06
    %v2005 = vadd.f32 %v1973, 2.7557319e-06
    %v2006 = vadd.f32 %v1974, 2.7557319e-06
    %v2007 = vadd.f32 %v1975, 2.7557319e-06
    %v2008 = vadd.f32 %v1976, 2.7557319e-06
    %v2009 = vadd.f32 %v1977, 2.7557319e-06
    %v2010 = vadd.f32 %v1978, 2.7557319e-06
    %v2011 = vmul.f32 %v1979, %v1915
    %v2012 = vmul.f32 %v1980, %v1916
    %v2013 = vmul.f32 %v1981, %v1917
    %v2014 = vmul.f32 %v1982, %v1918
    %v2015 = vmul.f32 %v1983, %v1919
    %v2016 = vmul.f32 %v1984, %v1920
    %v2017 = vmul.f32 %v1985, %v1921
    %v2018 = vmul.f32 %v1986, %v1922
    %v2019 = vmul.f32 %v1987, %v1923
    %v2020 = vmul.f32 %v1988, %v1924
    %v2021 = vmul.f32 %v1989, %v1925
    %v2022 = vmul.f32 %v1990, %v1926
    %v2023 = vmul.f32 %v1991, %v1927
    %v2024 = vmul.f32 %v1992, %v1928
    %v2025 = vmul.f32 %v1993, %v1929
    %v2026 = vmul.f32 %v1994, %v1930
    %v2027 = vmul.f32 %v1995, %v1931
    %v2028 = vmul.f32 %v1996, %v1932
    %v2029 = vmul.f32 %v1997, %v1933
    %v2030 = vmul.f32 %v1998, %v1934
    %v2031 = vmul.f32 %v1999, %v1935
    %v2032 = vmul.f32 %v2000, %v1936
    %v2033 = vmul.f32 %v2001, %v1937
    %v2034 = vmul.f32 %v2002, %v1938
    %v2035 = vmul.f32 %v2003, %v1939
    %v2036 = vmul.f32 %v2004, %v1940
    %v2037 = vmul.f32 %v2005, %v1941
    %v2038 = vmul.f32 %v2006, %v1942
    %v2039 = vmul.f32 %v2007, %v1943
    %v2040 = vmul.f32 %v2008, %v1944
    %v2041 = vmul.f32 %v2009, %v1945
    %v2042 = vmul.f32 %v2010, %v1946
    %v2043 = vsub.f32 %v2011, 0.0001984127
    %v2044 = vsub.f32 %v2012, 0.0001984127
    %v2045 = vsub.f32 %v2013, 0.0001984127
    %v2046 = vsub.f32 %v2014, 0.0001984127
    %v2047 = vsub.f32 %v2015, 0.0001984127
    %v2048 = vsub.f32 %v2016, 0.0001984127
    %v2049 = vsub.f32 %v2017, 0.0001984127
    %v2050 = vsub.f32 %v2018, 0.0001984127
    %v2051 = vsub.f32 %v2019, 0.0001984127
    %v2052 = vsub.f32 %v2020, 0.0001984127
    %v2053 = vsub.f32 %v2021, 0.0001984127
    %v2054 = vsub.f32 %v2022, 0.0001984127
    %v2055 = vsub.f32 %v2023, 0.0001984127
    %v2056 = vsub.f32 %v2024, 0.0001984127
    %v2057 = vsub.f32 %v2025, 0.0001984127
    %v2058 = vsub.f32 %v2026, 0.0001984127
    %v2059 = vsub.f32 %v2027, 0.0001984127
    %v2060 = vsub.f32 %v2028, 0.0001984127
    %v2061 = vsub.f32 %v2029, 0.0001984127
    %v2062 = vsub.f32 %v2030, 0.0001984127
    %v2063 = vsub.f32 %v2031, 0.0001984127
    %v2064 = vsub.f32 %v2032, 0.0001984127
    %v2065 = vsub.f32 %v2033, 0.0001984127
    %v2066 = vsub.f32 %v2034, 0.0001984127
    %v2067 = vsub.f32 %v2035, 0.0001984127
    %v2068 = vsub.f32 %v2036, 0.0001984127
    %v2069 = vsub.f32 %v2037, 0.0001984127
    %v2070 = vsub.f32 %v2038, 0.0001984127
    %v2071 = vsub.f32 %v2039, 0.0001984127
    %v2072 = vsub.f32 %v2040, 0.0001984127
    %v2073 = vsub.f32 %v2041, 0.0001984127
    %v2074 = vsub.f32 %v2042, 0.0001984127
    %v2075 = vmul.f32 %v2043, %v1915
    %v2076 = vmul.f32 %v2044, %v1916
    %v2077 = vmul.f32 %v2045, %v1917
    %v2078 = vmul.f32 %v2046, %v1918
    %v2079 = vmul.f32 %v2047, %v1919
    %v2080 = vmul.f32 %v2048, %v1920
    %v2081 = vmul.f32 %v2049, %v1921
    %v2082 = vmul.f32 %v2050, %v1922
    %v2083 = vmul.f32 %v2051, %v1923
    %v2084 = vmul.f32 %v2052, %v1924
    %v2085 = vmul.f32 %v2053, %v1925
    %v2086 = vmul.f32 %v2054, %v1926
    %v2087 = vmul.f32 %v2055, %v1927
    %v2088 = vmul.f32 %v2056, %v1928
    %v2089 = vmul.f32 %v2057, %v1929
    %v2090 = vmul.f32 %v2058, %v1930
    %v2091 = vmul.f32 %v2059, %v1931
    %v2092 = vmul.f32 %v2060, %v1932
    %v2093 = vmul.f32 %v2061, %v1933
    %v2094 = vmul.f32 %v2062, %v1934
    %v2095 = vmul.f32 %v2063, %v1935
    %v2096 = vmul.f32 %v2064, %v1936
    %v2097 = vmul.f32 %v2065, %v1937
    %v2098 = vmul.f32 %v2066, %v1938
    %v2099 = vmul.f32 %v2067, %v1939
    %v2100 = vmul.f32 %v2068, %v1940
    %v2101 = vmul.f32 %v2069, %v1941
    %v2102 = vmul.f32 %v2070, %v1942
    %v2103 = vmul.f32 %v2071, %v1943
    %v2104 = vmul.f32 %v2072, %v1944
    %v2105 = vmul.f32 %v2073, %v1945
    %v2106 = vmul.f32 %v2074, %v1946
    %v2107 = vadd.f32 %v2075, 0.008333333
    %v2108 = vadd.f32 %v2076, 0.008333333
    %v2109 = vadd.f32 %v2077, 0.008333333
    %v2110 = vadd.f32 %v2078, 0.008333333
    %v2111 = vadd.f32 %v2079, 0.008333333
    %v2112 = vadd.f32 %v2080, 0.008333333
    %v2113 = vadd.f32 %v2081, 0.008333333
    %v2114 = vadd.f32 %v2082, 0.008333333
    %v2115 = vadd.f32 %v2083, 0.008333333
    %v2116 = vadd.f32 %v2084, 0.008333333
    %v2117 = vadd.f32 %v2085, 0.008333333
    %v2118 = vadd.f32 %v2086, 0.008333333
    %v2119 = vadd.f32 %v2087, 0.008333333
    %v2120 = vadd.f32 %v2088, 0.008333333
    %v2121 = vadd.f32 %v2089, 0.008333333
    %v2122 = vadd.f32 %v2090, 0.008333333
    %v2123 = vadd.f32 %v2091, 0.008333333
    %v2124 = vadd.f32 %v2092, 0.008333333
    %v2125 = vadd.f32 %v2093, 0.008333333
    %v2126 = vadd.f32 %v2094, 0.008333333
    %v2127 = vadd.f32 %v2095, 0.008333333
    %v2128 = vadd.f32 %v2096, 0.008333333
    %v2129 = vadd.f32 %v2097, 0.008333333
    %v2130 = vadd.f32 %v2098, 0.008333333
    %v2131 = vadd.f32 %v2099, 0.008333333
    %v2132 = vadd.f32 %v2100, 0.008333333
    %v2133 = vadd.f32 %v2101, 0.008333333
    %v2134 = vadd.f32 %v2102, 0.008333333
    %v2135 = vadd.f32 %v2103, 0.008333333
    %v2136 = vadd.f32 %v2104, 0.008333333
    %v2137 = vadd.f32 %v2105, 0.008333333
    %v2138 = vadd.f32 %v2106, 0.008333333
    %v2139 = vmul.f32 %v2107, %v1915
    %v2140 = vmul.f32 %v2108, %v1916
    %v2141 = vmul.f32 %v2109, %v1917
    %v2142 = vmul.f32 %v2110, %v1918
    %v2143 = vmul.f32 %v2111, %v1919
    %v2144 = vmul.f32 %v2112, %v1920
    %v2145 = vmul.f32 %v2113, %v1921
    %v2146 = vmul.f32 %v2114, %v1922
    %v2147 = vmul.f32 %v2115, %v1923
    %v2148 = vmul.f32 %v2116, %v1924
    %v2149 = vmul.f32 %v2117, %v1925
    %v2150 = vmul.f32 %v2118, %v1926
    %v2151 = vmul.f32 %v2119, %v1927
    %v2152 = vmul.f32 %v2120, %v1928
    %v2153 = vmul.f32 %v2121, %v1929
    %v2154 = vmul.f32 %v2122, %v1930
    %v2155 = vmul.f32 %v2123, %v1931
    %v2156 = vmul.f32 %v2124, %v1932
    %v2157 = vmul.f32 %v2125, %v1933
    %v2158 = vmul.f32 %v2126, %v1934
    %v2159 = vmul.f32 %v2127, %v1935
    %v2160 = vmul.f32 %v2128, %v1936
    %v2161 = vmul.f32 %v2129, %v1937
    %v2162 = vmul.f32 %v2130, %v1938
    %v2163 = vmul.f32 %v2131, %v1939
    %v2164 = vmul.f32 %v2132, %v1940
    %v2165 = vmul.f32 %v2133, %v1941
    %v2166 = vmul.f32 %v2134, %v1942
    %v2167 = vmul.f32 %v2135, %v1943
    %v2168 = vmul.f32 %v2136, %v1944
    %v2169 = vmul.f32 %v2137, %v1945
    %v2170 = vmul.f32 %v2138, %v1946
    %v2171 = vsub.f32 %v2139, 0.16666667
    %v2172 = vsub.f32 %v2140, 0.16666667
    %v2173 = vsub.f32 %v2141, 0.16666667
    %v2174 = vsub.f32 %v2142, 0.16666667
    %v2175 = vsub.f32 %v2143, 0.16666667
    %v2176 = vsub.f32 %v2144, 0.16666667
    %v2177 = vsub.f32 %v2145, 0.16666667
    %v2178 = vsub.f32 %v2146, 0.16666667
    %v2179 = vsub.f32 %v2147, 0.16666667
    %v2180 = vsub.f32 %v2148, 0.16666667
    %v2181 = vsub.f32 %v2149, 0.16666667
    %v2182 = vsub.f32 %v2150, 0.16666667
    %v2183 = vsub.f32 %v2151, 0.16666667
    %v2184 = vsub.f32 %v2152, 0.16666667
    %v2185 = vsub.f32 %v2153, 0.16666667
    %v2186 = vsub.f32 %v2154, 0.16666667
    %v2187 = vsub.f32 %v2155, 0.16666667
    %v2188 = vsub.f32 %v2156, 0.16666667
    %v2189 = vsub.f32 %v2157, 0.16666667
    %v2190 = vsub.f32 %v2158, 0.16666667
    %v2191 = vsub.f32 %v2159, 0.16666667
    %v2192 = vsub.f32 %v2160, 0.16666667
    %v2193 = vsub.f32 %v2161, 0.16666667
    %v2194 = vsub.f32 %v2162, 0.16666667
    %v2195 = vsub.f32 %v2163, 0.16666667
    %v2196 = vsub.f32 %v2164, 0.16666667
    %v2197 = vsub.f32 %v2165, 0.16666667
    %v2198 = vsub.f32 %v2166, 0.16666667
    %v2199 = vsub.f32 %v2167, 0.16666667
    %v2200 = vsub.f32 %v2168, 0.16666667
    %v2201 = vsub.f32 %v2169, 0.16666667
    %v2202 = vsub.f32 %v2170, 0.16666667
    %v2203 = vmul.f32 %v2171, %v1915
    %v2204 = vmul.f32 %v2172, %v1916
    %v2205 = vmul.f32 %v2173, %v1917
    %v2206 = vmul.f32 %v2174, %v1918
    %v2207 = vmul.f32 %v2175, %v1919
    %v2208 = vmul.f32 %v2176, %v1920
    %v2209 = vmul.f32 %v2177, %v1921
    %v2210 = vmul.f32 %v2178, %v1922
    %v2211 = vmul.f32 %v2179, %v1923
    %v2212 = vmul.f32 %v2180, %v1924
    %v2213 = vmul.f32 %v2181, %v1925
    %v2214 = vmul.f32 %v2182, %v1926
    %v2215 = vmul.f32 %v2183, %v1927
    %v2216 = vmul.f32 %v2184, %v1928
    %v2217 = vmul.f32 %v2185, %v1929
    %v2218 = vmul.f32 %v2186, %v1930
    %v2219 = vmul.f32 %v2187, %v1931
    %v2220 = vmul.f32 %v2188, %v1932
    %v2221 = vmul.f32 %v2189, %v1933
    %v2222 = vmul.f32 %v2190, %v1934
    %v2223 = vmul.f32 %v2191, %v1935
    %v2224 = vmul.f32 %v2192, %v1936
    %v2225 = vmul.f32 %v2193, %v1937
    %v2226 = vmul.f32 %v2194, %v1938
    %v2227 = vmul.f32 %v2195, %v1939
    %v2228 = vmul.f32 %v2196, %v1940
    %v2229 = vmul.f32 %v2197, %v1941
    %v2230 = vmul.f32 %v2198, %v1942
    %v2231 = vmul.f32 %v2199, %v1943
    %v2232 = vmul.f32 %v2200, %v1944
    %v2233 = vmul.f32 %v2201, %v1945
    %v2234 = vmul.f32 %v2202, %v1946
    %v2235 = vadd.f32 %v2203, 1.0
    %v2236 = vadd.f32 %v2204, 1.0
    %v2237 = vadd.f32 %v2205, 1.0
    %v2238 = vadd.f32 %v2206, 1.0
    %v2239 = vadd.f32 %v2207, 1.0
    %v2240 = vadd.f32 %v2208, 1.0
    %v2241 = vadd.f32 %v2209, 1.0
    %v2242 = vadd.f32 %v2210, 1.0
    %v2243 = vadd.f32 %v2211, 1.0
    %v2244 = vadd.f32 %v2212, 1.0
    %v2245 = vadd.f32 %v2213, 1.0
    %v2246 = vadd.f32 %v2214, 1.0
    %v2247 = vadd.f32 %v2215, 1.0
    %v2248 = vadd.f32 %v2216, 1.0
    %v2249 = vadd.f32 %v2217, 1.0
    %v2250 = vadd.f32 %v2218, 1.0
    %v2251 = vadd.f32 %v2219, 1.0
    %v2252 = vadd.f32 %v2220, 1.0
    %v2253 = vadd.f32 %v2221, 1.0
    %v2254 = vadd.f32 %v2222, 1.0
    %v2255 = vadd.f32 %v2223, 1.0
    %v2256 = vadd.f32 %v2224, 1.0
    %v2257 = vadd.f32 %v2225, 1.0
    %v2258 = vadd.f32 %v2226, 1.0
    %v2259 = vadd.f32 %v2227, 1.0
    %v2260 = vadd.f32 %v2228, 1.0
    %v2261 = vadd.f32 %v2229, 1.0
    %v2262 = vadd.f32 %v2230, 1.0
    %v2263 = vadd.f32 %v2231, 1.0
    %v2264 = vadd.f32 %v2232, 1.0
    %v2265 = vadd.f32 %v2233, 1.0
    %v2266 = vadd.f32 %v2234, 1.0
    %v2267 = vmul.f32 %v1883, %v1691
    %v2268 = vmul.f32 %v1884, %v1692
    %v2269 = vmul.f32 %v1885, %v1693
    %v2270 = vmul.f32 %v1886, %v1694
    %v2271 = vmul.f32 %v1887, %v1695
    %v2272 = vmul.f32 %v1888, %v1696
    %v2273 = vmul.f32 %v1889, %v1697
    %v2274 = vmul.f32 %v1890, %v1698
    %v2275 = vmul.f32 %v1891, %v1699
    %v2276 = vmul.f32 %v1892, %v1700
    %v2277 = vmul.f32 %v1893, %v1701
    %v2278 = vmul.f32 %v1894, %v1702
    %v2279 = vmul.f32 %v1895, %v1703
    %v2280 = vmul.f32 %v1896, %v1704
    %v2281 = vmul.f32 %v1897, %v1705
    %v2282 = vmul.f32 %v1898, %v1706
    %v2283 = vmul.f32 %v1899, %v1707
    %v2284 = vmul.f32 %v1900, %v1708
    %v2285 = vmul.f32 %v1901, %v1709
    %v2286 = vmul.f32 %v1902, %v1710
    %v2287 = vmul.f32 %v1903, %v1711
    %v2288 = vmul.f32 %v1904, %v1712
    %v2289 = vmul.f32 %v1905, %v1713
    %v2290 = vmul.f32 %v1906, %v1714
    %v2291 = vmul.f32 %v1907, %v1715
    %v2292 = vmul.f32 %v1908, %v1716
    %v2293 = vmul.f32 %v1909, %v1717
    %v2294 = vmul.f32 %v1910, %v1718
    %v2295 = vmul.f32 %v1911, %v1719
    %v2296 = vmul.f32 %v1912, %v1720
    %v2297 = vmul.f32 %v1913, %v1721
    %v2298 = vmul.f32 %v1914, %v1722
    %v2299 = vmul.f32 %v2267, %v2235
    %v2300 = vmul.f32 %v2268, %v2236
    %v2301 = vmul.f32 %v2269, %v2237
    %v2302 = vmul.f32 %v2270, %v2238
    %v2303 = vmul.f32 %v2271, %v2239
    %v2304 = vmul.f32 %v2272, %v2240
    %v2305 = vmul.f32 %v2273, %v2241
    %v2306 = vmul.f32 %v2274, %v2242
    %v2307 = vmul.f32 %v2275, %v2243
    %v2308 = vmul.f32 %v2276, %v2244
    %v2309 = vmul.f32 %v2277, %v2245
    %v2310 = vmul.f32 %v2278, %v2246
    %v2311 = vmul.f32 %v2279, %v2247
    %v2312 = vmul.f32 %v2280, %v2248
    %v2313 = vmul.f32 %v2281, %v2249
    %v2314 = vmul.f32 %v2282, %v2250
    %v2315 = vmul.f32 %v2283, %v2251
    %v2316 = vmul.f32 %v2284, %v2252
    %v2317 = vmul.f32 %v2285, %v2253
    %v2318 = vmul.f32 %v2286, %v2254
    %v2319 = vmul.f32 %v2287, %v2255
    %v2320 = vmul.f32 %v2288, %v2256
    %v2321 = vmul.f32 %v2289, %v2257
    %v2322 = vmul.f32 %v2290, %v2258
    %v2323 = vmul.f32 %v2291, %v2259
    %v2324 = vmul.f32 %v2292, %v2260
    %v2325 = vmul.f32 %v2293, %v2261
    %v2326 = vmul.f32 %v2294, %v2262
    %v2327 = vmul.f32 %v2295, %v2263
    %v2328 = vmul.f32 %v2296, %v2264
    %v2329 = vmul.f32 %v2297, %v2265
    %v2330 = vmul.f32 %v2298, %v2266
    %v2331 = vld [vmem:[%s3] sm:$0x1]
    %vm2332 = vcmask 523264
    %v2334 = vsel %vm2332, %v2331, 0
    %2336 = vmatprep.subr.mxu0 %v2300
    %2337 = vmatpush1.msra.mxu0 %v2299
    %2338 = vmatprep.subr.mxu0 %v2304
    %2339 = vmatpush1.msra.mxu0 %v2303
    %2340 = vmatprep.subr.mxu0 %v2308
    %2341 = vmatpush1.msra.mxu0 %v2307
    %2342 = vmatprep.subr.mxu0 %v2312
    %2343 = vmatpush1.msra.mxu0 %v2311
    %2344 = vmatprep.subr.mxu0 %v2316
    %2345 = vmatpush1.msra.mxu0 %v2315
    %2346 = vmatprep.subr.mxu0 %v2320
    %2347 = vmatpush1.msra.mxu0 %v2319
    %2348 = vmatprep.subr.mxu0 %v2324
    %2349 = vmatpush1.msra.mxu0 %v2323
    %2350 = vmatprep.subr.mxu0 %v2328
    %2351 = vmatpush1.msra.mxu0 %v2327
    %2352 = vmatprep.subr.mxu0 0.0
    %2353 = vmatpush1.msra.mxu0 0.0
    %2354 = vmatprep.subr.mxu0 0.0
    %2355 = vmatpush1.msra.mxu0 0.0
    %2356 = vmatprep.subr.mxu0 0.0
    %2357 = vmatpush1.msra.mxu0 0.0
    %2358 = vmatprep.subr.mxu0 0.0
    %2359 = vmatpush1.msra.mxu0 0.0
    %2360 = vmatprep.subr.mxu0 0.0
    %2361 = vmatpush1.msra.mxu0 0.0
    %2362 = vmatprep.subr.mxu0 0.0
    %2363 = vmatpush1.msra.mxu0 0.0
    %2364 = vmatprep.subr.mxu0 0.0
    %2365 = vmatpush1.msra.mxu0 0.0
    %2366 = vmatprep.subr.mxu0 0.0
    %2367 = vmatpush1.msra.mxu0 0.0
    %2368 = vmatprep.subr.mxu0 0.0
    %2369 = vmatpush1.msra.mxu0 0.0
    %2370 = vmatprep.subr.mxu0 0.0
    %2371 = vmatpush1.msra.mxu0 0.0
    %2372 = vmatprep.subr.mxu0 0.0
    %2373 = vmatpush1.msra.mxu0 0.0
    %2374 = vmatprep.subr.mxu0 0.0
    %2375 = vmatpush1.msra.mxu0 0.0
    %2376 = vmatprep.subr.mxu0 0.0
    %2377 = vmatpush1.msra.mxu0 0.0
    %2378 = vmatprep.subr.mxu0 0.0
    %2379 = vmatpush1.msra.mxu0 0.0
    %2380 = vmatprep.subr.mxu0 0.0
    %2381 = vmatpush1.msra.mxu0 0.0
    %2382 = vmatprep.subr.mxu0 0.0
    %2383 = vmatpush1.msra.mxu0 0.0
    %2384 = vmatprep.subr.mxu0 0.0
    %2385 = vmatpush1.msra.mxu0 0.0
    %2386 = vmatprep.subr.mxu0 0.0
    %2387 = vmatpush1.msra.mxu0 0.0
    %2388 = vmatprep.subr.mxu0 0.0
    %2389 = vmatpush1.msra.mxu0 0.0
    %2390 = vmatprep.subr.mxu0 0.0
    %2391 = vmatpush1.msra.mxu0 0.0
    %2392 = vmatprep.subr.mxu0 0.0
    %2393 = vmatpush1.msra.mxu0 0.0
    %2394 = vmatprep.subr.mxu0 0.0
    %2395 = vmatpush1.msra.mxu0 0.0
    %2396 = vmatprep.subr.mxu0 0.0
    %2397 = vmatpush1.msra.mxu0 0.0
    %2398 = vmatprep.subr.mxu0 0.0
    %2399 = vmatpush1.msra.mxu0 0.0
    %2400 = vmatprep.mubr.f32.mxu0 0.0
    %2401 = vmatmul.mubr.f32.gmra.mrb[0].mxu0 %v2334
    %v2402 = vpop.f32.mrb[0].mxu0
    %v2403 = vadd.f32 0.0, %v2402
    %v2404 = vpop.f32.mrb[0].mxu0
    %v2405 = vadd.f32 0.0, %v2404
    %2406 = vdwg.mxu0
    %2407 = vmatprep.subr.mxu0 %v2302
    %2408 = vmatpush1.msra.mxu0 %v2301
    %2409 = vmatprep.subr.mxu0 %v2306
    %2410 = vmatpush1.msra.mxu0 %v2305
    %2411 = vmatprep.subr.mxu0 %v2310
    %2412 = vmatpush1.msra.mxu0 %v2309
    %2413 = vmatprep.subr.mxu0 %v2314
    %2414 = vmatpush1.msra.mxu0 %v2313
    %2415 = vmatprep.subr.mxu0 %v2318
    %2416 = vmatpush1.msra.mxu0 %v2317
    %2417 = vmatprep.subr.mxu0 %v2322
    %2418 = vmatpush1.msra.mxu0 %v2321
    %2419 = vmatprep.subr.mxu0 %v2326
    %2420 = vmatpush1.msra.mxu0 %v2325
    %2421 = vmatprep.subr.mxu0 %v2330
    %2422 = vmatpush1.msra.mxu0 %v2329
    %2423 = vmatprep.subr.mxu0 0.0
    %2424 = vmatpush1.msra.mxu0 0.0
    %2425 = vmatprep.subr.mxu0 0.0
    %2426 = vmatpush1.msra.mxu0 0.0
    %2427 = vmatprep.subr.mxu0 0.0
    %2428 = vmatpush1.msra.mxu0 0.0
    %2429 = vmatprep.subr.mxu0 0.0
    %2430 = vmatpush1.msra.mxu0 0.0
    %2431 = vmatprep.subr.mxu0 0.0
    %2432 = vmatpush1.msra.mxu0 0.0
    %2433 = vmatprep.subr.mxu0 0.0
    %2434 = vmatpush1.msra.mxu0 0.0
    %2435 = vmatprep.subr.mxu0 0.0
    %2436 = vmatpush1.msra.mxu0 0.0
    %2437 = vmatprep.subr.mxu0 0.0
    %2438 = vmatpush1.msra.mxu0 0.0
    %2439 = vmatprep.subr.mxu0 0.0
    %2440 = vmatpush1.msra.mxu0 0.0
    %2441 = vmatprep.subr.mxu0 0.0
    %2442 = vmatpush1.msra.mxu0 0.0
    %2443 = vmatprep.subr.mxu0 0.0
    %2444 = vmatpush1.msra.mxu0 0.0
    %2445 = vmatprep.subr.mxu0 0.0
    %2446 = vmatpush1.msra.mxu0 0.0
    %2447 = vmatprep.subr.mxu0 0.0
    %2448 = vmatpush1.msra.mxu0 0.0
    %2449 = vmatprep.subr.mxu0 0.0
    %2450 = vmatpush1.msra.mxu0 0.0
    %2451 = vmatprep.subr.mxu0 0.0
    %2452 = vmatpush1.msra.mxu0 0.0
    %2453 = vmatprep.subr.mxu0 0.0
    %2454 = vmatpush1.msra.mxu0 0.0
    %2455 = vmatprep.subr.mxu0 0.0
    %2456 = vmatpush1.msra.mxu0 0.0
    %2457 = vmatprep.subr.mxu0 0.0
    %2458 = vmatpush1.msra.mxu0 0.0
    %2459 = vmatprep.subr.mxu0 0.0
    %2460 = vmatpush1.msra.mxu0 0.0
    %2461 = vmatprep.subr.mxu0 0.0
    %2462 = vmatpush1.msra.mxu0 0.0
    %2463 = vmatprep.subr.mxu0 0.0
    %2464 = vmatpush1.msra.mxu0 0.0
    %2465 = vmatprep.subr.mxu0 0.0
    %2466 = vmatpush1.msra.mxu0 0.0
    %2467 = vmatprep.subr.mxu0 0.0
    %2468 = vmatpush1.msra.mxu0 0.0
    %2469 = vmatprep.subr.mxu0 0.0
    %2470 = vmatpush1.msra.mxu0 0.0
    %2471 = vmatprep.mubr.f32.mxu0 0.0
    %2472 = vmatmul.mubr.f32.gmra.mrb[0].mxu0 %v2334
    %v2473 = vpop.f32.mrb[0].mxu0
    %v2474 = vadd.f32 0.0, %v2473
    %v2475 = vpop.f32.mrb[0].mxu0
    %v2476 = vadd.f32 0.0, %v2475
    %2477 = vdwg.mxu0
    %v2482 = vcombine.low %v2403, %v2405
    %v2483 = vcombine.low %v2474, %v2476
    %v2485 = vunpack.c.l.s4 1966171168
    %v2486 = vunpack.c.0.s8 %v2485
    %v2487 = vlaneseq
    %v2488 = vshrl.u32 %v2487, 7
    %v2489 = vsub.s32 %v2486, %v2488
    %v2490 = vrot.slane %v2482, %v2489
    %v2492 = vunpack.c.l.s4 1966171168
    %v2493 = vunpack.c.0.s8 %v2492
    %v2494 = vlaneseq
    %v2495 = vshrl.u32 %v2494, 7
    %v2496 = vsub.s32 %v2493, %v2495
    %v2497 = vrot.slane %v2483, %v2496
    %v2498 = vcombine.low %v2490, %v2497
    %v2500 = vunpack.c.l.s4 1966171168
    %v2501 = vunpack.c.0.s8 %v2500
    %v2502 = vlaneseq
    %v2503 = vshrl.u32 %v2502, 7
    %v2504 = vsub.s32 %v2501, %v2503
    %v2505 = vrot.slane %v2498, %v2504
    %2507 = vst.msk [vmem:[#allocation8] sm:$0xf] %vm1187, %v2505
    // Predicated region
    $region26: #{_lambda_.1} parent=1 // pred_check
      _
    $region27: #{_lambda_.1} parent=1 // pred_check_branch
      %2509 = sbr.rel (0) target = $region29
    $region28: #{_lambda_.1} parent=1 // pred_region
      %s2511 = ssub.s32 64, 64
      %2512 = vsyncadd [#allocation5], %s2511
      %s2514 = sshll.u32 [#allocation8], 4
      %s2515 = int_to_ptr.vmem [resolvable:$true] %s2514
      %2517 = dma.vmem_to_hbm [thread:$0]  %s2515, 64, %s4, [#allocation5]
    $region29: #{_lambda_.1} parent=1 // pred_fallthru
      _
    // Predicated region
    $region30: #{_lambda_.1} parent=1 // pred_check
      _
    $region31: #{_lambda_.1} parent=1 // pred_check_branch
      %2519 = sbr.rel (0) target = $region33
    $region32: #{_lambda_.1} parent=1 // pred_region
      %2520 = dma.done [#allocation5], 64
    $region33: #{_lambda_.1} parent=1 // pred_fallthru
      _
    %2521 = vsyncpa [#allocation4], 1
    %2522 = vsyncpa [#allocation7], 1
    %2523 = vsyncpa [#allocation5], 1

</llo_original>
